<compile_context>
chip_gen: v6e
topology: v6e:2x2x1
jax: 0.10.0
libtpu: 0.0.40
codegen_flags: <defaults>
</compile_context>

<pallas_src>
import functools

import jax
import jax.numpy as jnp
from jax.experimental import pallas as pl
from jax.experimental.pallas import tpu as pltpu

_LANE = 128  # pad all feature dims to this lane width


# ----------------------------- Pallas kernel ------------------------------- #

def _fused_kernel(cols_ref, wc_ref, w1_ref, g_ref, b_ref, we_ref, be_ref,
                  wo_ref, bo_ref, logits_ref, embeds_ref, *, batch, spatial):
    """Fused encoder stub + projection head + classifier.

    cols: [B*P, Kp] bf16, wc: [Kp, 128] bf16, w1/we/wo: [128,128] bf16,
    gamma/beta/be/bo: [1,128] f32  ->  logits/embeds: [B,128] f32 (zero-padded).
    """
    # --- encoder stub: conv3x3 as one flat MXU matmul + ReLU + global pool ---
    conv = jnp.dot(cols_ref[...], wc_ref[...],
                   preferred_element_type=jnp.float32)          # [B*P, 128] f32
    conv = jnp.maximum(conv, 0.0)                                # ReLU
    # leading-dim reshape is free; mean over spatial dim is a sublane reduce.
    feats = jnp.mean(conv.reshape(batch, spatial, _LANE), axis=1)  # [B, 128]

    # --- head: Linear(D0, D0, bias=False) ------------------------------------
    h = jnp.dot(feats.astype(jnp.bfloat16), w1_ref[...],
                preferred_element_type=jnp.float32)             # [B, 128]
    # --- BatchNorm1d(D0): train-mode batch stats, biased variance (f32) ------
    mu = jnp.mean(h, axis=0, keepdims=True)
    var = jnp.mean((h - mu) ** 2, axis=0, keepdims=True)
    h = (h - mu) * jax.lax.rsqrt(var + 1e-5) * g_ref[...] + b_ref[...]
    # --- ReLU(inplace=True) ---------------------------------------------------
    h = jnp.maximum(h, 0.0)
    # --- embeds = Linear(D0, D1, bias=True) -----------------------------------
    e = jnp.dot(h.astype(jnp.bfloat16), we_ref[...],
                preferred_element_type=jnp.float32) + be_ref[...]
    # --- logits = out Linear(D1, classes) -------------------------------------
    logits_ref[...] = jnp.dot(e.astype(jnp.bfloat16), wo_ref[...],
                              preferred_element_type=jnp.float32) + bo_ref[...]
    embeds_ref[...] = e


# ------------------------------ JAX-side glue ------------------------------ #

def _pad2(a, rows, cols):
    return jnp.pad(a, ((0, rows - a.shape[0]), (0, cols - a.shape[1])))


def _im2col_flat(x, k=3, pad=1):
    """NCHW -> [B*H*W, Cin*k*k]; column order (cin, ki, kj) matches
    torch conv weight.reshape(Cout, Cin*k*k)."""
    B, C, H, W = x.shape
    xp = jnp.pad(x, ((0, 0), (0, 0), (pad, pad), (pad, pad)))
    patches = [xp[:, :, i:i + H, j:j + W] for i in range(k) for j in range(k)]
    cols = jnp.stack(patches, axis=2)            # [B, C, k*k, H, W]
    cols = cols.transpose(0, 3, 4, 1, 2)         # [B, H, W, C, k*k]
    return cols.reshape(B * H * W, C * k * k)


def _prepare_args(x, w_conv, w1, gamma, beta, w_emb, b_emb, w_out, b_out):
    """Pad every feature dim to 128 lanes, cast matmul operands to bf16."""
    B, Cin, H, W = x.shape
    P = H * W
    Cf = w_conv.shape[0]
    D0 = w1.shape[0]
    D1 = w_emb.shape[0]
    classes = w_out.shape[0]
    K = Cin * 3 * 3
    Kp = pl.cdiv(K, _LANE) * _LANE
    assert max(Cf, D0, D1, classes) <= _LANE, "feature dims must fit one lane tile"

    cols = _pad2(_im2col_flat(x), B * P, Kp).astype(jnp.bfloat16)       # [B*P,Kp]
    wc = _pad2(w_conv.reshape(Cf, K).T, Kp, _LANE).astype(jnp.bfloat16)  # [Kp,128]
    w1p = _pad2(w1.T, _LANE, _LANE).astype(jnp.bfloat16)                 # x @ W^T
    gp = _pad2(gamma.reshape(1, D0), 1, _LANE)                           # f32
    bp = _pad2(beta.reshape(1, D0), 1, _LANE)                            # f32
    wep = _pad2(w_emb.T, _LANE, _LANE).astype(jnp.bfloat16)
    bep = _pad2(b_emb.reshape(1, D1), 1, _LANE)                          # f32
    wop = _pad2(w_out.T, _LANE, _LANE).astype(jnp.bfloat16)
    bop = _pad2(b_out.reshape(1, classes), 1, _LANE)                     # f32
    args = (cols, wc, w1p, gp, bp, wep, bep, wop, bop)
    return args, (B, P, D1, classes)


@jax.jit
def projection_net_forward(x, w_conv, w1, gamma, beta, w_emb, b_emb,
                           w_out, b_out):
    args, (B, P, D1, classes) = _prepare_args(
        x, w_conv, w1, gamma, beta, w_emb, b_emb, w_out, b_out)

    kern = functools.partial(_fused_kernel, batch=B, spatial=P)
    out_spec = pl.BlockSpec((B, _LANE), lambda i: (0, 0))
    logits_p, embeds_p = pl.pallas_call(
        kern,
        grid=(1,),
        in_specs=[pl.BlockSpec(a.shape, lambda i: (0, 0)) for a in args],
        out_specs=[out_spec, out_spec],
        out_shape=(jax.ShapeDtypeStruct((B, _LANE), jnp.float32),
                   jax.ShapeDtypeStruct((B, _LANE), jnp.float32)),
        compiler_params=pltpu.CompilerParams(
            dimension_semantics=("arbitrary",)),
    )(*args)
    # Slice the lane-padded outputs back to their true widths.
    return logits_p[:, :classes], embeds_p[:, :D1]


@jax.jit
def projection_net_reference(x, w_conv, w1, gamma, beta, w_emb, b_emb,
                             w_out, b_out):
    """Pure-JAX reference using the same padded bf16 operands as the kernel."""
    (cols, wc, w1p, gp, bp, wep, bep, wop, bop), (B, P, D1, classes) = \
        _prepare_args(x, w_conv, w1, gamma, beta, w_emb, b_emb, w_out, b_out)
    conv = jnp.maximum(jnp.dot(cols, wc, preferred_element_type=jnp.float32), 0.0)
    feats = jnp.mean(conv.reshape(B, P, _LANE), axis=1)
    h = jnp.dot(feats.astype(jnp.bfloat16), w1p, preferred_element_type=jnp.float32)
    mu = jnp.mean(h, axis=0, keepdims=True)
    var = jnp.mean((h - mu) ** 2, axis=0, keepdims=True)
    h = jnp.maximum((h - mu) * jax.lax.rsqrt(var + 1e-5) * gp + bp, 0.0)
    e = jnp.dot(h.astype(jnp.bfloat16), wep, preferred_element_type=jnp.float32) + bep
    logits = jnp.dot(e.astype(jnp.bfloat16), wop,
                     preferred_element_type=jnp.float32) + bop
    return logits[:, :classes], e[:, :D1]


# --------------------------------- driver ---------------------------------- #

if __name__ == "__main__":
    key = jax.random.PRNGKey(0)
    B, Cin, H, W = 8, 4, 16, 16   # B=8 fills the sublane dim of the outputs
    head_dims = (32, 16)          # encoder feature dim == head_dims[0]
    classes = 2
    Cf = head_dims[0]

    ks = jax.random.split(key, 8)
    x = jax.random.normal(ks[0], (B, Cin, H, W), jnp.float32)

    # Deterministic synthetic parameters (PyTorch layouts).
    w_conv = 0.1 * jax.random.normal(ks[1], (Cf, Cin, 3, 3), jnp.float32)
    w1 = 0.1 * jax.random.normal(ks[2], (head_dims[0], head_dims[0]), jnp.float32)
    gamma = 1.0 + 0.1 * jax.random.normal(ks[3], (head_dims[0],), jnp.float32)
    beta = 0.05 * jax.random.normal(ks[4], (head_dims[0],), jnp.float32)
    w_emb = 0.1 * jax.random.normal(ks[5], (head_dims[1], head_dims[0]), jnp.float32)
    b_emb = 0.02 * jax.random.normal(ks[6], (head_dims[1],), jnp.float32)
    w_out = 0.1 * jax.random.normal(ks[7], (classes, head_dims[1]), jnp.float32)
    b_out = jnp.zeros((classes,), jnp.float32)

    params = (x, w_conv, w1, gamma, beta, w_emb, b_emb, w_out, b_out)

    logits, embeds = projection_net_forward(*params)
    jax.block_until_ready((logits, embeds))

    ref_logits, ref_embeds = projection_net_reference(*params)
    jax.block_until_ready((ref_logits, ref_embeds))

    assert logits.shape == (B, classes) and embeds.shape == (B, head_dims[1])
    assert jnp.all(jnp.isfinite(logits)) and jnp.all(jnp.isfinite(embeds))
    assert jnp.allclose(logits, ref_logits, rtol=2e-2, atol=2e-2)
    assert jnp.allclose(embeds, ref_embeds, rtol=2e-2, atol=2e-2)
    print("KERNEL_OK")
</pallas_src>

<mosaic_0001>
module attributes {stable_mosaic.version = 11 : i64} {
  func.func @_fused_kernel(%arg0: i32, %arg1: memref<2048x128xbf16, #tpu.memory_space<vmem>>, %arg2: memref<128x128xbf16, #tpu.memory_space<vmem>>, %arg3: memref<128x128xbf16, #tpu.memory_space<vmem>>, %arg4: memref<1x128xf32, #tpu.memory_space<vmem>>, %arg5: memref<1x128xf32, #tpu.memory_space<vmem>>, %arg6: memref<128x128xbf16, #tpu.memory_space<vmem>>, %arg7: memref<1x128xf32, #tpu.memory_space<vmem>>, %arg8: memref<128x128xbf16, #tpu.memory_space<vmem>>, %arg9: memref<1x128xf32, #tpu.memory_space<vmem>>, %arg10: memref<8x128xf32, #tpu.memory_space<vmem>>, %arg11: memref<8x128xf32, #tpu.memory_space<vmem>>) attributes {dimension_semantics = [#tpu.dimension_semantics<arbitrary>], iteration_bounds = array<i64: 1>, scalar_prefetch = 0 : i64, scratch_operands = 0 : i64, tpu.core_type = #tpu.core_type<tc>, window_params = [{pipeline_mode = #tpu.pipeline_mode<synchronous>, transform_indices = @transform_0, window_bounds = array<i64: 2048, 128>}, {pipeline_mode = #tpu.pipeline_mode<synchronous>, transform_indices = @transform_1, window_bounds = array<i64: 128, 128>}, {pipeline_mode = #tpu.pipeline_mode<synchronous>, transform_indices = @transform_2, window_bounds = array<i64: 128, 128>}, {pipeline_mode = #tpu.pipeline_mode<synchronous>, transform_indices = @transform_3, window_bounds = array<i64: 1, 128>}, {pipeline_mode = #tpu.pipeline_mode<synchronous>, transform_indices = @transform_4, window_bounds = array<i64: 1, 128>}, {pipeline_mode = #tpu.pipeline_mode<synchronous>, transform_indices = @transform_5, window_bounds = array<i64: 128, 128>}, {pipeline_mode = #tpu.pipeline_mode<synchronous>, transform_indices = @transform_6, window_bounds = array<i64: 1, 128>}, {pipeline_mode = #tpu.pipeline_mode<synchronous>, transform_indices = @transform_7, window_bounds = array<i64: 128, 128>}, {pipeline_mode = #tpu.pipeline_mode<synchronous>, transform_indices = @transform_8, window_bounds = array<i64: 1, 128>}, {pipeline_mode = #tpu.pipeline_mode<synchronous>, transform_indices = @transform_9, window_bounds = array<i64: 8, 128>}, {pipeline_mode = #tpu.pipeline_mode<synchronous>, transform_indices = @transform_10, window_bounds = array<i64: 8, 128>}]} {
    %c0 = arith.constant 0 : index
    %c0_0 = arith.constant 0 : index
    %0 = vector.load %arg1[%c0, %c0_0] : memref<2048x128xbf16, #tpu.memory_space<vmem>>, vector<2048x128xbf16>
    %c0_1 = arith.constant 0 : index
    %c0_2 = arith.constant 0 : index
    %1 = vector.load %arg2[%c0_1, %c0_2] : memref<128x128xbf16, #tpu.memory_space<vmem>>, vector<128x128xbf16>
    %cst = arith.constant dense<0.000000e+00> : vector<2048x128xf32>
    %2 = tpu.matmul %0, %1, %cst {dimension_numbers = #tpu.dot_dimension_numbers<[1], [0], [0], [1], [0, 0, 1, 1], [], []>} : vector<2048x128xbf16>, vector<128x128xbf16>, vector<2048x128xf32> -> vector<2048x128xf32>
    %cst_3 = arith.constant 0.000000e+00 : f32
    %3 = vector.broadcast %cst_3 : f32 to vector<2048x128xf32>
    %4 = arith.maximumf %2, %3 : vector<2048x128xf32>
    %5 = vector.shape_cast %4 : vector<2048x128xf32> to vector<8x256x128xf32>
    %cst_4 = arith.constant dense<0.000000e+00> : vector<8x128xf32>
    %6 = vector.multi_reduction <add>, %5, %cst_4 [1] : vector<8x256x128xf32> to vector<8x128xf32>
    %cst_5 = arith.constant 2.560000e+02 : f32
    %7 = vector.broadcast %cst_5 : f32 to vector<8x128xf32>
    %8 = arith.divf %6, %7 : vector<8x128xf32>
    %9 = arith.truncf %8 : vector<8x128xf32> to vector<8x128xbf16>
    %c0_6 = arith.constant 0 : index
    %c0_7 = arith.constant 0 : index
    %10 = vector.load %arg3[%c0_6, %c0_7] : memref<128x128xbf16, #tpu.memory_space<vmem>>, vector<128x128xbf16>
    %cst_8 = arith.constant dense<0.000000e+00> : vector<8x128xf32>
    %11 = tpu.matmul %9, %10, %cst_8 {dimension_numbers = #tpu.dot_dimension_numbers<[1], [0], [0], [1], [0, 0, 1, 1], [], []>} : vector<8x128xbf16>, vector<128x128xbf16>, vector<8x128xf32> -> vector<8x128xf32>
    %cst_9 = arith.constant dense<0.000000e+00> : vector<128xf32>
    %12 = vector.multi_reduction <add>, %11, %cst_9 [0] : vector<8x128xf32> to vector<128xf32>
    %13 = vector.shape_cast %12 : vector<128xf32> to vector<1x128xf32>
    %cst_10 = arith.constant 8.000000e+00 : f32
    %14 = vector.broadcast %cst_10 : f32 to vector<1x128xf32>
    %15 = arith.divf %13, %14 : vector<1x128xf32>
    %16 = vector.broadcast %15 : vector<1x128xf32> to vector<8x128xf32>
    %17 = arith.subf %11, %16 : vector<8x128xf32>
    %18 = arith.mulf %17, %17 : vector<8x128xf32>
    %cst_11 = arith.constant dense<0.000000e+00> : vector<128xf32>
    %19 = vector.multi_reduction <add>, %18, %cst_11 [0] : vector<8x128xf32> to vector<128xf32>
    %20 = vector.shape_cast %19 : vector<128xf32> to vector<1x128xf32>
    %cst_12 = arith.constant 8.000000e+00 : f32
    %21 = vector.broadcast %cst_12 : f32 to vector<1x128xf32>
    %22 = arith.divf %20, %21 : vector<1x128xf32>
    %23 = vector.broadcast %15 : vector<1x128xf32> to vector<8x128xf32>
    %24 = arith.subf %11, %23 : vector<8x128xf32>
    %cst_13 = arith.constant 9.99999974E-6 : f32
    %25 = vector.broadcast %cst_13 : f32 to vector<1x128xf32>
    %26 = arith.addf %22, %25 : vector<1x128xf32>
    %27 = math.rsqrt %26 : vector<1x128xf32>
    %28 = vector.broadcast %27 : vector<1x128xf32> to vector<8x128xf32>
    %29 = arith.mulf %24, %28 : vector<8x128xf32>
    %c0_14 = arith.constant 0 : index
    %c0_15 = arith.constant 0 : index
    %30 = vector.load %arg4[%c0_14, %c0_15] : memref<1x128xf32, #tpu.memory_space<vmem>>, vector<1x128xf32>
    %31 = vector.broadcast %30 : vector<1x128xf32> to vector<8x128xf32>
    %32 = arith.mulf %29, %31 : vector<8x128xf32>
    %c0_16 = arith.constant 0 : index
    %c0_17 = arith.constant 0 : index
    %33 = vector.load %arg5[%c0_16, %c0_17] : memref<1x128xf32, #tpu.memory_space<vmem>>, vector<1x128xf32>
    %34 = vector.broadcast %33 : vector<1x128xf32> to vector<8x128xf32>
    %35 = arith.addf %32, %34 : vector<8x128xf32>
    %cst_18 = arith.constant 0.000000e+00 : f32
    %36 = vector.broadcast %cst_18 : f32 to vector<8x128xf32>
    %37 = arith.maximumf %35, %36 : vector<8x128xf32>
    %38 = arith.truncf %37 : vector<8x128xf32> to vector<8x128xbf16>
    %c0_19 = arith.constant 0 : index
    %c0_20 = arith.constant 0 : index
    %39 = vector.load %arg6[%c0_19, %c0_20] : memref<128x128xbf16, #tpu.memory_space<vmem>>, vector<128x128xbf16>
    %cst_21 = arith.constant dense<0.000000e+00> : vector<8x128xf32>
    %40 = tpu.matmul %38, %39, %cst_21 {dimension_numbers = #tpu.dot_dimension_numbers<[1], [0], [0], [1], [0, 0, 1, 1], [], []>} : vector<8x128xbf16>, vector<128x128xbf16>, vector<8x128xf32> -> vector<8x128xf32>
    %c0_22 = arith.constant 0 : index
    %c0_23 = arith.constant 0 : index
    %41 = vector.load %arg7[%c0_22, %c0_23] : memref<1x128xf32, #tpu.memory_space<vmem>>, vector<1x128xf32>
    %42 = vector.broadcast %41 : vector<1x128xf32> to vector<8x128xf32>
    %43 = arith.addf %40, %42 : vector<8x128xf32>
    %44 = arith.truncf %43 : vector<8x128xf32> to vector<8x128xbf16>
    %c0_24 = arith.constant 0 : index
    %c0_25 = arith.constant 0 : index
    %45 = vector.load %arg8[%c0_24, %c0_25] : memref<128x128xbf16, #tpu.memory_space<vmem>>, vector<128x128xbf16>
    %cst_26 = arith.constant dense<0.000000e+00> : vector<8x128xf32>
    %46 = tpu.matmul %44, %45, %cst_26 {dimension_numbers = #tpu.dot_dimension_numbers<[1], [0], [0], [1], [0, 0, 1, 1], [], []>} : vector<8x128xbf16>, vector<128x128xbf16>, vector<8x128xf32> -> vector<8x128xf32>
    %c0_27 = arith.constant 0 : index
    %c0_28 = arith.constant 0 : index
    %47 = vector.load %arg9[%c0_27, %c0_28] : memref<1x128xf32, #tpu.memory_space<vmem>>, vector<1x128xf32>
    %48 = vector.broadcast %47 : vector<1x128xf32> to vector<8x128xf32>
    %49 = arith.addf %46, %48 : vector<8x128xf32>
    %c0_29 = arith.constant 0 : index
    %c0_30 = arith.constant 0 : index
    %50 = vector.load %arg10[%c0_29, %c0_30] : memref<8x128xf32, #tpu.memory_space<vmem>>, vector<8x128xf32>
    tpu.vector_store %arg10[%c0_29, %c0_30], %49 {strides = array<i32>} : memref<8x128xf32, #tpu.memory_space<vmem>>, vector<8x128xf32>,
    %c0_31 = arith.constant 0 : index
    %c0_32 = arith.constant 0 : index
    %51 = vector.load %arg11[%c0_31, %c0_32] : memref<8x128xf32, #tpu.memory_space<vmem>>, vector<8x128xf32>
    tpu.vector_store %arg11[%c0_31, %c0_32], %43 {strides = array<i32>} : memref<8x128xf32, #tpu.memory_space<vmem>>, vector<8x128xf32>,
    return
  }
  func.func @transform_0(%arg0: i32) -> (i32, i32) {
    %c0_i32 = arith.constant 0 : i32
    %c0_i32_0 = arith.constant 0 : i32
    %c0_i32_1 = arith.constant 0 : i32
    return %c0_i32, %c0_i32_0 : i32, i32
  }
  func.func @transform_1(%arg0: i32) -> (i32, i32) {
    %c0_i32 = arith.constant 0 : i32
    %c0_i32_0 = arith.constant 0 : i32
    %c0_i32_1 = arith.constant 0 : i32
    return %c0_i32, %c0_i32_0 : i32, i32
  }
  func.func @transform_2(%arg0: i32) -> (i32, i32) {
    %c0_i32 = arith.constant 0 : i32
    %c0_i32_0 = arith.constant 0 : i32
    %c0_i32_1 = arith.constant 0 : i32
    return %c0_i32, %c0_i32_0 : i32, i32
  }
  func.func @transform_3(%arg0: i32) -> (i32, i32) {
    %c0_i32 = arith.constant 0 : i32
    %c0_i32_0 = arith.constant 0 : i32
    %c0_i32_1 = arith.constant 0 : i32
    return %c0_i32, %c0_i32_0 : i32, i32
  }
  func.func @transform_4(%arg0: i32) -> (i32, i32) {
    %c0_i32 = arith.constant 0 : i32
    %c0_i32_0 = arith.constant 0 : i32
    %c0_i32_1 = arith.constant 0 : i32
    return %c0_i32, %c0_i32_0 : i32, i32
  }
  func.func @transform_5(%arg0: i32) -> (i32, i32) {
    %c0_i32 = arith.constant 0 : i32
    %c0_i32_0 = arith.constant 0 : i32
    %c0_i32_1 = arith.constant 0 : i32
    return %c0_i32, %c0_i32_0 : i32, i32
  }
  func.func @transform_6(%arg0: i32) -> (i32, i32) {
    %c0_i32 = arith.constant 0 : i32
    %c0_i32_0 = arith.constant 0 : i32
    %c0_i32_1 = arith.constant 0 : i32
    return %c0_i32, %c0_i32_0 : i32, i32
  }
  func.func @transform_7(%arg0: i32) -> (i32, i32) {
    %c0_i32 = arith.constant 0 : i32
    %c0_i32_0 = arith.constant 0 : i32
    %c0_i32_1 = arith.constant 0 : i32
    return %c0_i32, %c0_i32_0 : i32, i32
  }
  func.func @transform_8(%arg0: i32) -> (i32, i32) {
    %c0_i32 = arith.constant 0 : i32
    %c0_i32_0 = arith.constant 0 : i32
    %c0_i32_1 = arith.constant 0 : i32
    return %c0_i32, %c0_i32_0 : i32, i32
  }
  func.func @transform_9(%arg0: i32) -> (i32, i32) {
    %c0_i32 = arith.constant 0 : i32
    %c0_i32_0 = arith.constant 0 : i32
    %c0_i32_1 = arith.constant 0 : i32
    return %c0_i32, %c0_i32_0 : i32, i32
  }
  func.func @transform_10(%arg0: i32) -> (i32, i32) {
    %c0_i32 = arith.constant 0 : i32
    %c0_i32_0 = arith.constant 0 : i32
    %c0_i32_1 = arith.constant 0 : i32
    return %c0_i32, %c0_i32_0 : i32, i32
  }
}

</mosaic_0001>

<llo_original>
// kernel: projection_net_forward.1
$region0: #{projection_net_forward.1}
  #allocation0 [shape = 'u32[]', space=smem, size = 0x4, offset = 0x4, fixed_abs, tag = 'smem constant byte address 0x4 - core index']
  #allocation1 [shape = 'u32[144,128]{1,0:T(1,128)}', space=vmem, size = 0x12000, scoped, tag = 'internal scratch']
  %s0 = inlined_call_operand.vmem [shape: bf16[2048,128], index: 0, kind: input, shape index: {}]
  %s1 = inlined_call_operand.vmem [shape: bf16[128,128], index: 1, kind: input, shape index: {}]
  %s2 = inlined_call_operand.vmem [shape: bf16[128,128], index: 2, kind: input, shape index: {}]
  %s3 = inlined_call_operand.vmem [shape: f32[1,128], index: 3, kind: input, shape index: {}]
  %s4 = inlined_call_operand.vmem [shape: f32[1,128], index: 4, kind: input, shape index: {}]
  %s5 = inlined_call_operand.vmem [shape: bf16[128,128], index: 5, kind: input, shape index: {}]
  %s6 = inlined_call_operand.vmem [shape: f32[1,128], index: 6, kind: input, shape index: {}]
  %s7 = inlined_call_operand.vmem [shape: bf16[128,128], index: 7, kind: input, shape index: {}]
  %s8 = inlined_call_operand.vmem [shape: f32[1,128], index: 8, kind: input, shape index: {}]
  %s9 = inlined_call_operand.vmem [shape: f32[8,128], index: 9, kind: output, shape index: {0}]
  %s10 = inlined_call_operand.hbm [shape: f32[8,128], index: 10, kind: output, shape index: {1}]
  %11 = xla_tuple %s9, %s10
  %s12 = sld [smem:[#allocation0]]
  $region54: #{projection_net_forward.1} parent=0
    _
  %s14 = ssub.s32 1, %s12
  %s15 = scalar_select 0, %s14, %s12
  $region1: #{projection_net_forward.1} parent=0
    #allocation2 [shape = 'u8[4096]{0}', space=vmem, size = 0x1000, scoped, tag = 'output window, operand 1, single buffered']
    #allocation3 [shape = 's32[1]{0}', space=sflag, size = 0x4, scoped, tag = 'scoped memory for projection_net_forward.1']
    %16 = vsyncpa [#allocation3], 0
    // Predicated region
    $region2: #{projection_net_forward.1} parent=1 // pred_check
      _
    $region3: #{projection_net_forward.1} parent=1 // pred_check_branch
      %18 = sbr.rel (0) target = $region5
    $region4: #{projection_net_forward.1} parent=1 // pred_region
      _
    $region5: #{projection_net_forward.1} parent=1 // pred_fallthru
      _
    // Predicated region
    $region6: #{projection_net_forward.1} parent=1 // pred_check
      _
    $region7: #{projection_net_forward.1} parent=1 // pred_check_branch
      %20 = sbr.rel (0) target = $region9
    $region8: #{projection_net_forward.1} parent=1 // pred_region
      _
    $region9: #{projection_net_forward.1} parent=1 // pred_fallthru
      _
    // Predicated region
    $region10: #{projection_net_forward.1} parent=1 // pred_check
      _
    $region11: #{projection_net_forward.1} parent=1 // pred_check_branch
      %22 = sbr.rel (0) target = $region13
    $region12: #{projection_net_forward.1} parent=1 // pred_region
      _
    $region13: #{projection_net_forward.1} parent=1 // pred_fallthru
      _
    // Predicated region
    $region14: #{projection_net_forward.1} parent=1 // pred_check
      _
    $region15: #{projection_net_forward.1} parent=1 // pred_check_branch
      %24 = sbr.rel (0) target = $region17
    $region16: #{projection_net_forward.1} parent=1 // pred_region
      _
    $region17: #{projection_net_forward.1} parent=1 // pred_fallthru
      _
    // Predicated region
    $region18: #{projection_net_forward.1} parent=1 // pred_check
      _
    $region19: #{projection_net_forward.1} parent=1 // pred_check_branch
      %26 = sbr.rel (0) target = $region21
    $region20: #{projection_net_forward.1} parent=1 // pred_region
      _
    $region21: #{projection_net_forward.1} parent=1 // pred_fallthru
      _
    // Predicated region
    $region22: #{projection_net_forward.1} parent=1 // pred_check
      _
    $region23: #{projection_net_forward.1} parent=1 // pred_check_branch
      %28 = sbr.rel (0) target = $region25
    $region24: #{projection_net_forward.1} parent=1 // pred_region
      _
    $region25: #{projection_net_forward.1} parent=1 // pred_fallthru
      _
    // Predicated region
    $region26: #{projection_net_forward.1} parent=1 // pred_check
      _
    $region27: #{projection_net_forward.1} parent=1 // pred_check_branch
      %30 = sbr.rel (0) target = $region29
    $region28: #{projection_net_forward.1} parent=1 // pred_region
      _
    $region29: #{projection_net_forward.1} parent=1 // pred_fallthru
      _
    // Predicated region
    $region30: #{projection_net_forward.1} parent=1 // pred_check
      _
    $region31: #{projection_net_forward.1} parent=1 // pred_check_branch
      %32 = sbr.rel (0) target = $region33
    $region32: #{projection_net_forward.1} parent=1 // pred_region
      _
    $region33: #{projection_net_forward.1} parent=1 // pred_fallthru
      _
    // Predicated region
    $region34: #{projection_net_forward.1} parent=1 // pred_check
      _
    $region35: #{projection_net_forward.1} parent=1 // pred_check_branch
      %34 = sbr.rel (0) target = $region37
    $region36: #{projection_net_forward.1} parent=1 // pred_region
      _
    $region37: #{projection_net_forward.1} parent=1 // pred_fallthru
      _
    %v36 = vld [vmem:[%s0] sm:$0xf]
    %v37 = vld [vmem:[%s0 + $0x4] sm:$0xf]
    %v38 = vld [vmem:[%s0 + $0x8] sm:$0xf]
    %v39 = vld [vmem:[%s0 + $0xc] sm:$0xf]
    %v40 = vld [vmem:[%s0 + $0x10] sm:$0xf]
    %v41 = vld [vmem:[%s0 + $0x14] sm:$0xf]
    %v42 = vld [vmem:[%s0 + $0x18] sm:$0xf]
    %v43 = vld [vmem:[%s0 + $0x1c] sm:$0xf]
    %v44 = vld [vmem:[%s0 + $0x20] sm:$0xf]
    %v45 = vld [vmem:[%s0 + $0x24] sm:$0xf]
    %v46 = vld [vmem:[%s0 + $0x28] sm:$0xf]
    %v47 = vld [vmem:[%s0 + $0x2c] sm:$0xf]
    %v48 = vld [vmem:[%s0 + $0x30] sm:$0xf]
    %v49 = vld [vmem:[%s0 + $0x34] sm:$0xf]
    %v50 = vld [vmem:[%s0 + $0x38] sm:$0xf]
    %v51 = vld [vmem:[%s0 + $0x3c] sm:$0xf]
    %v52 = vld [vmem:[%s0 + $0x40] sm:$0xf]
    %v53 = vld [vmem:[%s0 + $0x44] sm:$0xf]
    %v54 = vld [vmem:[%s0 + $0x48] sm:$0xf]
    %v55 = vld [vmem:[%s0 + $0x4c] sm:$0xf]
    %v56 = vld [vmem:[%s0 + $0x50] sm:$0xf]
    %v57 = vld [vmem:[%s0 + $0x54] sm:$0xf]
    %v58 = vld [vmem:[%s0 + $0x58] sm:$0xf]
    %v59 = vld [vmem:[%s0 + $0x5c] sm:$0xf]
    %v60 = vld [vmem:[%s0 + $0x60] sm:$0xf]
    %v61 = vld [vmem:[%s0 + $0x64] sm:$0xf]
    %v62 = vld [vmem:[%s0 + $0x68] sm:$0xf]
    %v63 = vld [vmem:[%s0 + $0x6c] sm:$0xf]
    %v64 = vld [vmem:[%s0 + $0x70] sm:$0xf]
    %v65 = vld [vmem:[%s0 + $0x74] sm:$0xf]
    %v66 = vld [vmem:[%s0 + $0x78] sm:$0xf]
    %v67 = vld [vmem:[%s0 + $0x7c] sm:$0xf]
    %v68 = vld [vmem:[%s0 + $0x80] sm:$0xf]
    %v69 = vld [vmem:[%s0 + $0x84] sm:$0xf]
    %v70 = vld [vmem:[%s0 + $0x88] sm:$0xf]
    %v71 = vld [vmem:[%s0 + $0x8c] sm:$0xf]
    %v72 = vld [vmem:[%s0 + $0x90] sm:$0xf]
    %v73 = vld [vmem:[%s0 + $0x94] sm:$0xf]
    %v74 = vld [vmem:[%s0 + $0x98] sm:$0xf]
    %v75 = vld [vmem:[%s0 + $0x9c] sm:$0xf]
    %v76 = vld [vmem:[%s0 + $0xa0] sm:$0xf]
    %v77 = vld [vmem:[%s0 + $0xa4] sm:$0xf]
    %v78 = vld [vmem:[%s0 + $0xa8] sm:$0xf]
    %v79 = vld [vmem:[%s0 + $0xac] sm:$0xf]
    %v80 = vld [vmem:[%s0 + $0xb0] sm:$0xf]
    %v81 = vld [vmem:[%s0 + $0xb4] sm:$0xf]
    %v82 = vld [vmem:[%s0 + $0xb8] sm:$0xf]
    %v83 = vld [vmem:[%s0 + $0xbc] sm:$0xf]
    %v84 = vld [vmem:[%s0 + $0xc0] sm:$0xf]
    %v85 = vld [vmem:[%s0 + $0xc4] sm:$0xf]
    %v86 = vld [vmem:[%s0 + $0xc8] sm:$0xf]
    %v87 = vld [vmem:[%s0 + $0xcc] sm:$0xf]
    %v88 = vld [vmem:[%s0 + $0xd0] sm:$0xf]
    %v89 = vld [vmem:[%s0 + $0xd4] sm:$0xf]
    %v90 = vld [vmem:[%s0 + $0xd8] sm:$0xf]
    %v91 = vld [vmem:[%s0 + $0xdc] sm:$0xf]
    %v92 = vld [vmem:[%s0 + $0xe0] sm:$0xf]
    %v93 = vld [vmem:[%s0 + $0xe4] sm:$0xf]
    %v94 = vld [vmem:[%s0 + $0xe8] sm:$0xf]
    %v95 = vld [vmem:[%s0 + $0xec] sm:$0xf]
    %v96 = vld [vmem:[%s0 + $0xf0] sm:$0xf]
    %v97 = vld [vmem:[%s0 + $0xf4] sm:$0xf]
    %v98 = vld [vmem:[%s0 + $0xf8] sm:$0xf]
    %v99 = vld [vmem:[%s0 + $0xfc] sm:$0xf]
    %v100 = vld [vmem:[%s0 + $0x100] sm:$0xf]
    %v101 = vld [vmem:[%s0 + $0x104] sm:$0xf]
    %v102 = vld [vmem:[%s0 + $0x108] sm:$0xf]
    %v103 = vld [vmem:[%s0 + $0x10c] sm:$0xf]
    %v104 = vld [vmem:[%s0 + $0x110] sm:$0xf]
    %v105 = vld [vmem:[%s0 + $0x114] sm:$0xf]
    %v106 = vld [vmem:[%s0 + $0x118] sm:$0xf]
    %v107 = vld [vmem:[%s0 + $0x11c] sm:$0xf]
    %v108 = vld [vmem:[%s0 + $0x120] sm:$0xf]
    %v109 = vld [vmem:[%s0 + $0x124] sm:$0xf]
    %v110 = vld [vmem:[%s0 + $0x128] sm:$0xf]
    %v111 = vld [vmem:[%s0 + $0x12c] sm:$0xf]
    %v112 = vld [vmem:[%s0 + $0x130] sm:$0xf]
    %v113 = vld [vmem:[%s0 + $0x134] sm:$0xf]
    %v114 = vld [vmem:[%s0 + $0x138] sm:$0xf]
    %v115 = vld [vmem:[%s0 + $0x13c] sm:$0xf]
    %v116 = vld [vmem:[%s0 + $0x140] sm:$0xf]
    %v117 = vld [vmem:[%s0 + $0x144] sm:$0xf]
    %v118 = vld [vmem:[%s0 + $0x148] sm:$0xf]
    %v119 = vld [vmem:[%s0 + $0x14c] sm:$0xf]
    %v120 = vld [vmem:[%s0 + $0x150] sm:$0xf]
    %v121 = vld [vmem:[%s0 + $0x154] sm:$0xf]
    %v122 = vld [vmem:[%s0 + $0x158] sm:$0xf]
    %v123 = vld [vmem:[%s0 + $0x15c] sm:$0xf]
    %v124 = vld [vmem:[%s0 + $0x160] sm:$0xf]
    %v125 = vld [vmem:[%s0 + $0x164] sm:$0xf]
    %v126 = vld [vmem:[%s0 + $0x168] sm:$0xf]
    %v127 = vld [vmem:[%s0 + $0x16c] sm:$0xf]
    %v128 = vld [vmem:[%s0 + $0x170] sm:$0xf]
    %v129 = vld [vmem:[%s0 + $0x174] sm:$0xf]
    %v130 = vld [vmem:[%s0 + $0x178] sm:$0xf]
    %v131 = vld [vmem:[%s0 + $0x17c] sm:$0xf]
    %v132 = vld [vmem:[%s0 + $0x180] sm:$0xf]
    %v133 = vld [vmem:[%s0 + $0x184] sm:$0xf]
    %v134 = vld [vmem:[%s0 + $0x188] sm:$0xf]
    %v135 = vld [vmem:[%s0 + $0x18c] sm:$0xf]
    %v136 = vld [vmem:[%s0 + $0x190] sm:$0xf]
    %v137 = vld [vmem:[%s0 + $0x194] sm:$0xf]
    %v138 = vld [vmem:[%s0 + $0x198] sm:$0xf]
    %v139 = vld [vmem:[%s0 + $0x19c] sm:$0xf]
    %v140 = vld [vmem:[%s0 + $0x1a0] sm:$0xf]
    %v141 = vld [vmem:[%s0 + $0x1a4] sm:$0xf]
    %v142 = vld [vmem:[%s0 + $0x1a8] sm:$0xf]
    %v143 = vld [vmem:[%s0 + $0x1ac] sm:$0xf]
    %v144 = vld [vmem:[%s0 + $0x1b0] sm:$0xf]
    %v145 = vld [vmem:[%s0 + $0x1b4] sm:$0xf]
    %v146 = vld [vmem:[%s0 + $0x1b8] sm:$0xf]
    %v147 = vld [vmem:[%s0 + $0x1bc] sm:$0xf]
    %v148 = vld [vmem:[%s0 + $0x1c0] sm:$0xf]
    %v149 = vld [vmem:[%s0 + $0x1c4] sm:$0xf]
    %v150 = vld [vmem:[%s0 + $0x1c8] sm:$0xf]
    %v151 = vld [vmem:[%s0 + $0x1cc] sm:$0xf]
    %v152 = vld [vmem:[%s0 + $0x1d0] sm:$0xf]
    %v153 = vld [vmem:[%s0 + $0x1d4] sm:$0xf]
    %v154 = vld [vmem:[%s0 + $0x1d8] sm:$0xf]
    %v155 = vld [vmem:[%s0 + $0x1dc] sm:$0xf]
    %v156 = vld [vmem:[%s0 + $0x1e0] sm:$0xf]
    %v157 = vld [vmem:[%s0 + $0x1e4] sm:$0xf]
    %v158 = vld [vmem:[%s0 + $0x1e8] sm:$0xf]
    %v159 = vld [vmem:[%s0 + $0x1ec] sm:$0xf]
    %v160 = vld [vmem:[%s0 + $0x1f0] sm:$0xf]
    %v161 = vld [vmem:[%s0 + $0x1f4] sm:$0xf]
    %v162 = vld [vmem:[%s0 + $0x1f8] sm:$0xf]
    %v163 = vld [vmem:[%s0 + $0x1fc] sm:$0xf]
    %v164 = vld [vmem:[%s0 + $0x200] sm:$0xf]
    %v165 = vld [vmem:[%s0 + $0x204] sm:$0xf]
    %v166 = vld [vmem:[%s0 + $0x208] sm:$0xf]
    %v167 = vld [vmem:[%s0 + $0x20c] sm:$0xf]
    %v168 = vld [vmem:[%s0 + $0x210] sm:$0xf]
    %v169 = vld [vmem:[%s0 + $0x214] sm:$0xf]
    %v170 = vld [vmem:[%s0 + $0x218] sm:$0xf]
    %v171 = vld [vmem:[%s0 + $0x21c] sm:$0xf]
    %v172 = vld [vmem:[%s0 + $0x220] sm:$0xf]
    %v173 = vld [vmem:[%s0 + $0x224] sm:$0xf]
    %v174 = vld [vmem:[%s0 + $0x228] sm:$0xf]
    %v175 = vld [vmem:[%s0 + $0x22c] sm:$0xf]
    %v176 = vld [vmem:[%s0 + $0x230] sm:$0xf]
    %v177 = vld [vmem:[%s0 + $0x234] sm:$0xf]
    %v178 = vld [vmem:[%s0 + $0x238] sm:$0xf]
    %v179 = vld [vmem:[%s0 + $0x23c] sm:$0xf]
    %v180 = vld [vmem:[%s0 + $0x240] sm:$0xf]
    %v181 = vld [vmem:[%s0 + $0x244] sm:$0xf]
    %v182 = vld [vmem:[%s0 + $0x248] sm:$0xf]
    %v183 = vld [vmem:[%s0 + $0x24c] sm:$0xf]
    %v184 = vld [vmem:[%s0 + $0x250] sm:$0xf]
    %v185 = vld [vmem:[%s0 + $0x254] sm:$0xf]
    %v186 = vld [vmem:[%s0 + $0x258] sm:$0xf]
    %v187 = vld [vmem:[%s0 + $0x25c] sm:$0xf]
    %v188 = vld [vmem:[%s0 + $0x260] sm:$0xf]
    %v189 = vld [vmem:[%s0 + $0x264] sm:$0xf]
    %v190 = vld [vmem:[%s0 + $0x268] sm:$0xf]
    %v191 = vld [vmem:[%s0 + $0x26c] sm:$0xf]
    %v192 = vld [vmem:[%s0 + $0x270] sm:$0xf]
    %v193 = vld [vmem:[%s0 + $0x274] sm:$0xf]
    %v194 = vld [vmem:[%s0 + $0x278] sm:$0xf]
    %v195 = vld [vmem:[%s0 + $0x27c] sm:$0xf]
    %v196 = vld [vmem:[%s0 + $0x280] sm:$0xf]
    %v197 = vld [vmem:[%s0 + $0x284] sm:$0xf]
    %v198 = vld [vmem:[%s0 + $0x288] sm:$0xf]
    %v199 = vld [vmem:[%s0 + $0x28c] sm:$0xf]
    %v200 = vld [vmem:[%s0 + $0x290] sm:$0xf]
    %v201 = vld [vmem:[%s0 + $0x294] sm:$0xf]
    %v202 = vld [vmem:[%s0 + $0x298] sm:$0xf]
    %v203 = vld [vmem:[%s0 + $0x29c] sm:$0xf]
    %v204 = vld [vmem:[%s0 + $0x2a0] sm:$0xf]
    %v205 = vld [vmem:[%s0 + $0x2a4] sm:$0xf]
    %v206 = vld [vmem:[%s0 + $0x2a8] sm:$0xf]
    %v207 = vld [vmem:[%s0 + $0x2ac] sm:$0xf]
    %v208 = vld [vmem:[%s0 + $0x2b0] sm:$0xf]
    %v209 = vld [vmem:[%s0 + $0x2b4] sm:$0xf]
    %v210 = vld [vmem:[%s0 + $0x2b8] sm:$0xf]
    %v211 = vld [vmem:[%s0 + $0x2bc] sm:$0xf]
    %v212 = vld [vmem:[%s0 + $0x2c0] sm:$0xf]
    %v213 = vld [vmem:[%s0 + $0x2c4] sm:$0xf]
    %v214 = vld [vmem:[%s0 + $0x2c8] sm:$0xf]
    %v215 = vld [vmem:[%s0 + $0x2cc] sm:$0xf]
    %v216 = vld [vmem:[%s0 + $0x2d0] sm:$0xf]
    %v217 = vld [vmem:[%s0 + $0x2d4] sm:$0xf]
    %v218 = vld [vmem:[%s0 + $0x2d8] sm:$0xf]
    %v219 = vld [vmem:[%s0 + $0x2dc] sm:$0xf]
    %v220 = vld [vmem:[%s0 + $0x2e0] sm:$0xf]
    %v221 = vld [vmem:[%s0 + $0x2e4] sm:$0xf]
    %v222 = vld [vmem:[%s0 + $0x2e8] sm:$0xf]
    %v223 = vld [vmem:[%s0 + $0x2ec] sm:$0xf]
    %v224 = vld [vmem:[%s0 + $0x2f0] sm:$0xf]
    %v225 = vld [vmem:[%s0 + $0x2f4] sm:$0xf]
    %v226 = vld [vmem:[%s0 + $0x2f8] sm:$0xf]
    %v227 = vld [vmem:[%s0 + $0x2fc] sm:$0xf]
    %v228 = vld [vmem:[%s0 + $0x300] sm:$0xf]
    %v229 = vld [vmem:[%s0 + $0x304] sm:$0xf]
    %v230 = vld [vmem:[%s0 + $0x308] sm:$0xf]
    %v231 = vld [vmem:[%s0 + $0x30c] sm:$0xf]
    %v232 = vld [vmem:[%s0 + $0x310] sm:$0xf]
    %v233 = vld [vmem:[%s0 + $0x314] sm:$0xf]
    %v234 = vld [vmem:[%s0 + $0x318] sm:$0xf]
    %v235 = vld [vmem:[%s0 + $0x31c] sm:$0xf]
    %v236 = vld [vmem:[%s0 + $0x320] sm:$0xf]
    %v237 = vld [vmem:[%s0 + $0x324] sm:$0xf]
    %v238 = vld [vmem:[%s0 + $0x328] sm:$0xf]
    %v239 = vld [vmem:[%s0 + $0x32c] sm:$0xf]
    %v240 = vld [vmem:[%s0 + $0x330] sm:$0xf]
    %v241 = vld [vmem:[%s0 + $0x334] sm:$0xf]
    %v242 = vld [vmem:[%s0 + $0x338] sm:$0xf]
    %v243 = vld [vmem:[%s0 + $0x33c] sm:$0xf]
    %v244 = vld [vmem:[%s0 + $0x340] sm:$0xf]
    %v245 = vld [vmem:[%s0 + $0x344] sm:$0xf]
    %v246 = vld [vmem:[%s0 + $0x348] sm:$0xf]
    %v247 = vld [vmem:[%s0 + $0x34c] sm:$0xf]
    %v248 = vld [vmem:[%s0 + $0x350] sm:$0xf]
    %v249 = vld [vmem:[%s0 + $0x354] sm:$0xf]
    %v250 = vld [vmem:[%s0 + $0x358] sm:$0xf]
    %v251 = vld [vmem:[%s0 + $0x35c] sm:$0xf]
    %v252 = vld [vmem:[%s0 + $0x360] sm:$0xf]
    %v253 = vld [vmem:[%s0 + $0x364] sm:$0xf]
    %v254 = vld [vmem:[%s0 + $0x368] sm:$0xf]
    %v255 = vld [vmem:[%s0 + $0x36c] sm:$0xf]
    %v256 = vld [vmem:[%s0 + $0x370] sm:$0xf]
    %v257 = vld [vmem:[%s0 + $0x374] sm:$0xf]
    %v258 = vld [vmem:[%s0 + $0x378] sm:$0xf]
    %v259 = vld [vmem:[%s0 + $0x37c] sm:$0xf]
    %v260 = vld [vmem:[%s0 + $0x380] sm:$0xf]
    %v261 = vld [vmem:[%s0 + $0x384] sm:$0xf]
    %v262 = vld [vmem:[%s0 + $0x388] sm:$0xf]
    %v263 = vld [vmem:[%s0 + $0x38c] sm:$0xf]
    %v264 = vld [vmem:[%s0 + $0x390] sm:$0xf]
    %v265 = vld [vmem:[%s0 + $0x394] sm:$0xf]
    %v266 = vld [vmem:[%s0 + $0x398] sm:$0xf]
    %v267 = vld [vmem:[%s0 + $0x39c] sm:$0xf]
    %v268 = vld [vmem:[%s0 + $0x3a0] sm:$0xf]
    %v269 = vld [vmem:[%s0 + $0x3a4] sm:$0xf]
    %v270 = vld [vmem:[%s0 + $0x3a8] sm:$0xf]
    %v271 = vld [vmem:[%s0 + $0x3ac] sm:$0xf]
    %v272 = vld [vmem:[%s0 + $0x3b0] sm:$0xf]
    %v273 = vld [vmem:[%s0 + $0x3b4] sm:$0xf]
    %v274 = vld [vmem:[%s0 + $0x3b8] sm:$0xf]
    %v275 = vld [vmem:[%s0 + $0x3bc] sm:$0xf]
    %v276 = vld [vmem:[%s0 + $0x3c0] sm:$0xf]
    %v277 = vld [vmem:[%s0 + $0x3c4] sm:$0xf]
    %v278 = vld [vmem:[%s0 + $0x3c8] sm:$0xf]
    %v279 = vld [vmem:[%s0 + $0x3cc] sm:$0xf]
    %v280 = vld [vmem:[%s0 + $0x3d0] sm:$0xf]
    %v281 = vld [vmem:[%s0 + $0x3d4] sm:$0xf]
    %v282 = vld [vmem:[%s0 + $0x3d8] sm:$0xf]
    %v283 = vld [vmem:[%s0 + $0x3dc] sm:$0xf]
    %v284 = vld [vmem:[%s0 + $0x3e0] sm:$0xf]
    %v285 = vld [vmem:[%s0 + $0x3e4] sm:$0xf]
    %v286 = vld [vmem:[%s0 + $0x3e8] sm:$0xf]
    %v287 = vld [vmem:[%s0 + $0x3ec] sm:$0xf]
    %v288 = vld [vmem:[%s0 + $0x3f0] sm:$0xf]
    %v289 = vld [vmem:[%s0 + $0x3f4] sm:$0xf]
    %v290 = vld [vmem:[%s0 + $0x3f8] sm:$0xf]
    %v291 = vld [vmem:[%s0 + $0x3fc] sm:$0xf]
    %v292 = vld [vmem:[%s1] sm:$0xf]
    %v293 = vld [vmem:[%s1 + $0x4] sm:$0xf]
    %v294 = vld [vmem:[%s1 + $0x8] sm:$0xf]
    %v295 = vld [vmem:[%s1 + $0xc] sm:$0xf]
    %v296 = vld [vmem:[%s1 + $0x10] sm:$0xf]
    %v297 = vld [vmem:[%s1 + $0x14] sm:$0xf]
    %v298 = vld [vmem:[%s1 + $0x18] sm:$0xf]
    %v299 = vld [vmem:[%s1 + $0x1c] sm:$0xf]
    %v300 = vld [vmem:[%s1 + $0x20] sm:$0xf]
    %v301 = vld [vmem:[%s1 + $0x24] sm:$0xf]
    %v302 = vld [vmem:[%s1 + $0x28] sm:$0xf]
    %v303 = vld [vmem:[%s1 + $0x2c] sm:$0xf]
    %v304 = vld [vmem:[%s1 + $0x30] sm:$0xf]
    %v305 = vld [vmem:[%s1 + $0x34] sm:$0xf]
    %v306 = vld [vmem:[%s1 + $0x38] sm:$0xf]
    %v307 = vld [vmem:[%s1 + $0x3c] sm:$0xf]
    %v564 = vunpack.c.l.b16 %v36
    %v565 = vunpack.c.l.b16 %v37
    %v566 = vunpack.c.l.b16 %v38
    %v567 = vunpack.c.l.b16 %v39
    %v568 = vunpack.c.l.b16 %v40
    %v569 = vunpack.c.l.b16 %v41
    %v570 = vunpack.c.l.b16 %v42
    %v571 = vunpack.c.l.b16 %v43
    %v572 = vunpack.c.l.b16 %v44
    %v573 = vunpack.c.l.b16 %v45
    %v574 = vunpack.c.l.b16 %v46
    %v575 = vunpack.c.l.b16 %v47
    %v576 = vunpack.c.l.b16 %v48
    %v577 = vunpack.c.l.b16 %v49
    %v578 = vunpack.c.l.b16 %v50
    %v579 = vunpack.c.l.b16 %v51
    %v580 = vunpack.c.l.b16 %v52
    %v581 = vunpack.c.l.b16 %v53
    %v582 = vunpack.c.l.b16 %v54
    %v583 = vunpack.c.l.b16 %v55
    %v584 = vunpack.c.l.b16 %v56
    %v585 = vunpack.c.l.b16 %v57
    %v586 = vunpack.c.l.b16 %v58
    %v587 = vunpack.c.l.b16 %v59
    %v588 = vunpack.c.l.b16 %v60
    %v589 = vunpack.c.l.b16 %v61
    %v590 = vunpack.c.l.b16 %v62
    %v591 = vunpack.c.l.b16 %v63
    %v592 = vunpack.c.l.b16 %v64
    %v593 = vunpack.c.l.b16 %v65
    %v594 = vunpack.c.l.b16 %v66
    %v595 = vunpack.c.l.b16 %v67
    %v596 = vunpack.c.l.b16 %v68
    %v597 = vunpack.c.l.b16 %v69
    %v598 = vunpack.c.l.b16 %v70
    %v599 = vunpack.c.l.b16 %v71
    %v600 = vunpack.c.l.b16 %v72
    %v601 = vunpack.c.l.b16 %v73
    %v602 = vunpack.c.l.b16 %v74
    %v603 = vunpack.c.l.b16 %v75
    %v604 = vunpack.c.l.b16 %v76
    %v605 = vunpack.c.l.b16 %v77
    %v606 = vunpack.c.l.b16 %v78
    %v607 = vunpack.c.l.b16 %v79
    %v608 = vunpack.c.l.b16 %v80
    %v609 = vunpack.c.l.b16 %v81
    %v610 = vunpack.c.l.b16 %v82
    %v611 = vunpack.c.l.b16 %v83
    %v612 = vunpack.c.l.b16 %v84
    %v613 = vunpack.c.l.b16 %v85
    %v614 = vunpack.c.l.b16 %v86
    %v615 = vunpack.c.l.b16 %v87
    %v616 = vunpack.c.l.b16 %v88
    %v617 = vunpack.c.l.b16 %v89
    %v618 = vunpack.c.l.b16 %v90
    %v619 = vunpack.c.l.b16 %v91
    %v620 = vunpack.c.l.b16 %v92
    %v621 = vunpack.c.l.b16 %v93
    %v622 = vunpack.c.l.b16 %v94
    %v623 = vunpack.c.l.b16 %v95
    %v624 = vunpack.c.l.b16 %v96
    %v625 = vunpack.c.l.b16 %v97
    %v626 = vunpack.c.l.b16 %v98
    %v627 = vunpack.c.l.b16 %v99
    %v628 = vunpack.c.l.b16 %v100
    %v629 = vunpack.c.l.b16 %v101
    %v630 = vunpack.c.l.b16 %v102
    %v631 = vunpack.c.l.b16 %v103
    %v632 = vunpack.c.l.b16 %v104
    %v633 = vunpack.c.l.b16 %v105
    %v634 = vunpack.c.l.b16 %v106
    %v635 = vunpack.c.l.b16 %v107
    %v636 = vunpack.c.l.b16 %v108
    %v637 = vunpack.c.l.b16 %v109
    %v638 = vunpack.c.l.b16 %v110
    %v639 = vunpack.c.l.b16 %v111
    %v640 = vunpack.c.l.b16 %v112
    %v641 = vunpack.c.l.b16 %v113
    %v642 = vunpack.c.l.b16 %v114
    %v643 = vunpack.c.l.b16 %v115
    %v644 = vunpack.c.l.b16 %v116
    %v645 = vunpack.c.l.b16 %v117
    %v646 = vunpack.c.l.b16 %v118
    %v647 = vunpack.c.l.b16 %v119
    %v648 = vunpack.c.l.b16 %v120
    %v649 = vunpack.c.l.b16 %v121
    %v650 = vunpack.c.l.b16 %v122
    %v651 = vunpack.c.l.b16 %v123
    %v652 = vunpack.c.l.b16 %v124
    %v653 = vunpack.c.l.b16 %v125
    %v654 = vunpack.c.l.b16 %v126
    %v655 = vunpack.c.l.b16 %v127
    %v656 = vunpack.c.l.b16 %v128
    %v657 = vunpack.c.l.b16 %v129
    %v658 = vunpack.c.l.b16 %v130
    %v659 = vunpack.c.l.b16 %v131
    %v660 = vunpack.c.l.b16 %v132
    %v661 = vunpack.c.l.b16 %v133
    %v662 = vunpack.c.l.b16 %v134
    %v663 = vunpack.c.l.b16 %v135
    %v664 = vunpack.c.l.b16 %v136
    %v665 = vunpack.c.l.b16 %v137
    %v666 = vunpack.c.l.b16 %v138
    %v667 = vunpack.c.l.b16 %v139
    %v668 = vunpack.c.l.b16 %v140
    %v669 = vunpack.c.l.b16 %v141
    %v670 = vunpack.c.l.b16 %v142
    %v671 = vunpack.c.l.b16 %v143
    %v672 = vunpack.c.l.b16 %v144
    %v673 = vunpack.c.l.b16 %v145
    %v674 = vunpack.c.l.b16 %v146
    %v675 = vunpack.c.l.b16 %v147
    %v676 = vunpack.c.l.b16 %v148
    %v677 = vunpack.c.l.b16 %v149
    %v678 = vunpack.c.l.b16 %v150
    %v679 = vunpack.c.l.b16 %v151
    %v680 = vunpack.c.l.b16 %v152
    %v681 = vunpack.c.l.b16 %v153
    %v682 = vunpack.c.l.b16 %v154
    %v683 = vunpack.c.l.b16 %v155
    %v684 = vunpack.c.l.b16 %v156
    %v685 = vunpack.c.l.b16 %v157
    %v686 = vunpack.c.l.b16 %v158
    %v687 = vunpack.c.l.b16 %v159
    %v688 = vunpack.c.l.b16 %v160
    %v689 = vunpack.c.l.b16 %v161
    %v690 = vunpack.c.l.b16 %v162
    %v691 = vunpack.c.l.b16 %v163
    %v692 = vunpack.c.l.b16 %v164
    %v693 = vunpack.c.l.b16 %v165
    %v694 = vunpack.c.l.b16 %v166
    %v695 = vunpack.c.l.b16 %v167
    %v696 = vunpack.c.l.b16 %v168
    %v697 = vunpack.c.l.b16 %v169
    %v698 = vunpack.c.l.b16 %v170
    %v699 = vunpack.c.l.b16 %v171
    %v700 = vunpack.c.l.b16 %v172
    %v701 = vunpack.c.l.b16 %v173
    %v702 = vunpack.c.l.b16 %v174
    %v703 = vunpack.c.l.b16 %v175
    %v704 = vunpack.c.l.b16 %v176
    %v705 = vunpack.c.l.b16 %v177
    %v706 = vunpack.c.l.b16 %v178
    %v707 = vunpack.c.l.b16 %v179
    %v708 = vunpack.c.l.b16 %v180
    %v709 = vunpack.c.l.b16 %v181
    %v710 = vunpack.c.l.b16 %v182
    %v711 = vunpack.c.l.b16 %v183
    %v712 = vunpack.c.l.b16 %v184
    %v713 = vunpack.c.l.b16 %v185
    %v714 = vunpack.c.l.b16 %v186
    %v715 = vunpack.c.l.b16 %v187
    %v716 = vunpack.c.l.b16 %v188
    %v717 = vunpack.c.l.b16 %v189
    %v718 = vunpack.c.l.b16 %v190
    %v719 = vunpack.c.l.b16 %v191
    %v720 = vunpack.c.l.b16 %v192
    %v721 = vunpack.c.l.b16 %v193
    %v722 = vunpack.c.l.b16 %v194
    %v723 = vunpack.c.l.b16 %v195
    %v724 = vunpack.c.l.b16 %v196
    %v725 = vunpack.c.l.b16 %v197
    %v726 = vunpack.c.l.b16 %v198
    %v727 = vunpack.c.l.b16 %v199
    %v728 = vunpack.c.l.b16 %v200
    %v729 = vunpack.c.l.b16 %v201
    %v730 = vunpack.c.l.b16 %v202
    %v731 = vunpack.c.l.b16 %v203
    %v732 = vunpack.c.l.b16 %v204
    %v733 = vunpack.c.l.b16 %v205
    %v734 = vunpack.c.l.b16 %v206
    %v735 = vunpack.c.l.b16 %v207
    %v736 = vunpack.c.l.b16 %v208
    %v737 = vunpack.c.l.b16 %v209
    %v738 = vunpack.c.l.b16 %v210
    %v739 = vunpack.c.l.b16 %v211
    %v740 = vunpack.c.l.b16 %v212
    %v741 = vunpack.c.l.b16 %v213
    %v742 = vunpack.c.l.b16 %v214
    %v743 = vunpack.c.l.b16 %v215
    %v744 = vunpack.c.l.b16 %v216
    %v745 = vunpack.c.l.b16 %v217
    %v746 = vunpack.c.l.b16 %v218
    %v747 = vunpack.c.l.b16 %v219
    %v748 = vunpack.c.l.b16 %v220
    %v749 = vunpack.c.l.b16 %v221
    %v750 = vunpack.c.l.b16 %v222
    %v751 = vunpack.c.l.b16 %v223
    %v752 = vunpack.c.l.b16 %v224
    %v753 = vunpack.c.l.b16 %v225
    %v754 = vunpack.c.l.b16 %v226
    %v755 = vunpack.c.l.b16 %v227
    %v756 = vunpack.c.l.b16 %v228
    %v757 = vunpack.c.l.b16 %v229
    %v758 = vunpack.c.l.b16 %v230
    %v759 = vunpack.c.l.b16 %v231
    %v760 = vunpack.c.l.b16 %v232
    %v761 = vunpack.c.l.b16 %v233
    %v762 = vunpack.c.l.b16 %v234
    %v763 = vunpack.c.l.b16 %v235
    %v764 = vunpack.c.l.b16 %v236
    %v765 = vunpack.c.l.b16 %v237
    %v766 = vunpack.c.l.b16 %v238
    %v767 = vunpack.c.l.b16 %v239
    %v768 = vunpack.c.l.b16 %v240
    %v769 = vunpack.c.l.b16 %v241
    %v770 = vunpack.c.l.b16 %v242
    %v771 = vunpack.c.l.b16 %v243
    %v772 = vunpack.c.l.b16 %v244
    %v773 = vunpack.c.l.b16 %v245
    %v774 = vunpack.c.l.b16 %v246
    %v775 = vunpack.c.l.b16 %v247
    %v776 = vunpack.c.l.b16 %v248
    %v777 = vunpack.c.l.b16 %v249
    %v778 = vunpack.c.l.b16 %v250
    %v779 = vunpack.c.l.b16 %v251
    %v780 = vunpack.c.l.b16 %v252
    %v781 = vunpack.c.l.b16 %v253
    %v782 = vunpack.c.l.b16 %v254
    %v783 = vunpack.c.l.b16 %v255
    %v784 = vunpack.c.l.b16 %v256
    %v785 = vunpack.c.l.b16 %v257
    %v786 = vunpack.c.l.b16 %v258
    %v787 = vunpack.c.l.b16 %v259
    %v788 = vunpack.c.l.b16 %v260
    %v789 = vunpack.c.l.b16 %v261
    %v790 = vunpack.c.l.b16 %v262
    %v791 = vunpack.c.l.b16 %v263
    %v792 = vunpack.c.l.b16 %v264
    %v793 = vunpack.c.l.b16 %v265
    %v794 = vunpack.c.l.b16 %v266
    %v795 = vunpack.c.l.b16 %v267
    %v796 = vunpack.c.l.b16 %v268
    %v797 = vunpack.c.l.b16 %v269
    %v798 = vunpack.c.l.b16 %v270
    %v799 = vunpack.c.l.b16 %v271
    %v800 = vunpack.c.l.b16 %v272
    %v801 = vunpack.c.l.b16 %v273
    %v802 = vunpack.c.l.b16 %v274
    %v803 = vunpack.c.l.b16 %v275
    %v804 = vunpack.c.l.b16 %v276
    %v805 = vunpack.c.l.b16 %v277
    %v806 = vunpack.c.l.b16 %v278
    %v807 = vunpack.c.l.b16 %v279
    %v808 = vunpack.c.l.b16 %v280
    %v809 = vunpack.c.l.b16 %v281
    %v810 = vunpack.c.l.b16 %v282
    %v811 = vunpack.c.l.b16 %v283
    %v812 = vunpack.c.l.b16 %v284
    %v813 = vunpack.c.l.b16 %v285
    %v814 = vunpack.c.l.b16 %v286
    %v815 = vunpack.c.l.b16 %v287
    %v816 = vunpack.c.l.b16 %v288
    %v817 = vunpack.c.l.b16 %v289
    %v818 = vunpack.c.l.b16 %v290
    %v819 = vunpack.c.l.b16 %v291
    %v820 = vpack.c.b16 %v565, %v564
    %v821 = vpack.c.b16 %v567, %v566
    %v822 = vpack.c.b16 %v569, %v568
    %v823 = vpack.c.b16 %v571, %v570
    %v824 = vpack.c.b16 %v573, %v572
    %v825 = vpack.c.b16 %v575, %v574
    %v826 = vpack.c.b16 %v577, %v576
    %v827 = vpack.c.b16 %v579, %v578
    %v828 = vpack.c.b16 %v581, %v580
    %v829 = vpack.c.b16 %v583, %v582
    %v830 = vpack.c.b16 %v585, %v584
    %v831 = vpack.c.b16 %v587, %v586
    %v832 = vpack.c.b16 %v589, %v588
    %v833 = vpack.c.b16 %v591, %v590
    %v834 = vpack.c.b16 %v593, %v592
    %v835 = vpack.c.b16 %v595, %v594
    %v836 = vpack.c.b16 %v597, %v596
    %v837 = vpack.c.b16 %v599, %v598
    %v838 = vpack.c.b16 %v601, %v600
    %v839 = vpack.c.b16 %v603, %v602
    %v840 = vpack.c.b16 %v605, %v604
    %v841 = vpack.c.b16 %v607, %v606
    %v842 = vpack.c.b16 %v609, %v608
    %v843 = vpack.c.b16 %v611, %v610
    %v844 = vpack.c.b16 %v613, %v612
    %v845 = vpack.c.b16 %v615, %v614
    %v846 = vpack.c.b16 %v617, %v616
    %v847 = vpack.c.b16 %v619, %v618
    %v848 = vpack.c.b16 %v621, %v620
    %v849 = vpack.c.b16 %v623, %v622
    %v850 = vpack.c.b16 %v625, %v624
    %v851 = vpack.c.b16 %v627, %v626
    %v852 = vpack.c.b16 %v629, %v628
    %v853 = vpack.c.b16 %v631, %v630
    %v854 = vpack.c.b16 %v633, %v632
    %v855 = vpack.c.b16 %v635, %v634
    %v856 = vpack.c.b16 %v637, %v636
    %v857 = vpack.c.b16 %v639, %v638
    %v858 = vpack.c.b16 %v641, %v640
    %v859 = vpack.c.b16 %v643, %v642
    %v860 = vpack.c.b16 %v645, %v644
    %v861 = vpack.c.b16 %v647, %v646
    %v862 = vpack.c.b16 %v649, %v648
    %v863 = vpack.c.b16 %v651, %v650
    %v864 = vpack.c.b16 %v653, %v652
    %v865 = vpack.c.b16 %v655, %v654
    %v866 = vpack.c.b16 %v657, %v656
    %v867 = vpack.c.b16 %v659, %v658
    %v868 = vpack.c.b16 %v661, %v660
    %v869 = vpack.c.b16 %v663, %v662
    %v870 = vpack.c.b16 %v665, %v664
    %v871 = vpack.c.b16 %v667, %v666
    %v872 = vpack.c.b16 %v669, %v668
    %v873 = vpack.c.b16 %v671, %v670
    %v874 = vpack.c.b16 %v673, %v672
    %v875 = vpack.c.b16 %v675, %v674
    %v876 = vpack.c.b16 %v677, %v676
    %v877 = vpack.c.b16 %v679, %v678
    %v878 = vpack.c.b16 %v681, %v680
    %v879 = vpack.c.b16 %v683, %v682
    %v880 = vpack.c.b16 %v685, %v684
    %v881 = vpack.c.b16 %v687, %v686
    %v882 = vpack.c.b16 %v689, %v688
    %v883 = vpack.c.b16 %v691, %v690
    %v884 = vpack.c.b16 %v693, %v692
    %v885 = vpack.c.b16 %v695, %v694
    %v886 = vpack.c.b16 %v697, %v696
    %v887 = vpack.c.b16 %v699, %v698
    %v888 = vpack.c.b16 %v701, %v700
    %v889 = vpack.c.b16 %v703, %v702
    %v890 = vpack.c.b16 %v705, %v704
    %v891 = vpack.c.b16 %v707, %v706
    %v892 = vpack.c.b16 %v709, %v708
    %v893 = vpack.c.b16 %v711, %v710
    %v894 = vpack.c.b16 %v713, %v712
    %v895 = vpack.c.b16 %v715, %v714
    %v896 = vpack.c.b16 %v717, %v716
    %v897 = vpack.c.b16 %v719, %v718
    %v898 = vpack.c.b16 %v721, %v720
    %v899 = vpack.c.b16 %v723, %v722
    %v900 = vpack.c.b16 %v725, %v724
    %v901 = vpack.c.b16 %v727, %v726
    %v902 = vpack.c.b16 %v729, %v728
    %v903 = vpack.c.b16 %v731, %v730
    %v904 = vpack.c.b16 %v733, %v732
    %v905 = vpack.c.b16 %v735, %v734
    %v906 = vpack.c.b16 %v737, %v736
    %v907 = vpack.c.b16 %v739, %v738
    %v908 = vpack.c.b16 %v741, %v740
    %v909 = vpack.c.b16 %v743, %v742
    %v910 = vpack.c.b16 %v745, %v744
    %v911 = vpack.c.b16 %v747, %v746
    %v912 = vpack.c.b16 %v749, %v748
    %v913 = vpack.c.b16 %v751, %v750
    %v914 = vpack.c.b16 %v753, %v752
    %v915 = vpack.c.b16 %v755, %v754
    %v916 = vpack.c.b16 %v757, %v756
    %v917 = vpack.c.b16 %v759, %v758
    %v918 = vpack.c.b16 %v761, %v760
    %v919 = vpack.c.b16 %v763, %v762
    %v920 = vpack.c.b16 %v765, %v764
    %v921 = vpack.c.b16 %v767, %v766
    %v922 = vpack.c.b16 %v769, %v768
    %v923 = vpack.c.b16 %v771, %v770
    %v924 = vpack.c.b16 %v773, %v772
    %v925 = vpack.c.b16 %v775, %v774
    %v926 = vpack.c.b16 %v777, %v776
    %v927 = vpack.c.b16 %v779, %v778
    %v928 = vpack.c.b16 %v781, %v780
    %v929 = vpack.c.b16 %v783, %v782
    %v930 = vpack.c.b16 %v785, %v784
    %v931 = vpack.c.b16 %v787, %v786
    %v932 = vpack.c.b16 %v789, %v788
    %v933 = vpack.c.b16 %v791, %v790
    %v934 = vpack.c.b16 %v793, %v792
    %v935 = vpack.c.b16 %v795, %v794
    %v936 = vpack.c.b16 %v797, %v796
    %v937 = vpack.c.b16 %v799, %v798
    %v938 = vpack.c.b16 %v801, %v800
    %v939 = vpack.c.b16 %v803, %v802
    %v940 = vpack.c.b16 %v805, %v804
    %v941 = vpack.c.b16 %v807, %v806
    %v942 = vpack.c.b16 %v809, %v808
    %v943 = vpack.c.b16 %v811, %v810
    %v944 = vpack.c.b16 %v813, %v812
    %v945 = vpack.c.b16 %v815, %v814
    %v946 = vpack.c.b16 %v817, %v816
    %v947 = vpack.c.b16 %v819, %v818
    %v1092 = vunpack.c.l.b16 %v292
    %v1093 = vunpack.c.l.b16 %v293
    %v1094 = vunpack.c.l.b16 %v294
    %v1095 = vunpack.c.l.b16 %v295
    %v1096 = vunpack.c.l.b16 %v296
    %v1097 = vunpack.c.l.b16 %v297
    %v1098 = vunpack.c.l.b16 %v298
    %v1099 = vunpack.c.l.b16 %v299
    %v1100 = vunpack.c.l.b16 %v300
    %v1101 = vunpack.c.l.b16 %v301
    %v1102 = vunpack.c.l.b16 %v302
    %v1103 = vunpack.c.l.b16 %v303
    %v1104 = vunpack.c.l.b16 %v304
    %v1105 = vunpack.c.l.b16 %v305
    %v1106 = vunpack.c.l.b16 %v306
    %v1107 = vunpack.c.l.b16 %v307
    %v1108 = vpack.c.b16 %v1093, %v1092
    %v1109 = vpack.c.b16 %v1095, %v1094
    %v1110 = vpack.c.b16 %v1097, %v1096
    %v1111 = vpack.c.b16 %v1099, %v1098
    %v1112 = vpack.c.b16 %v1101, %v1100
    %v1113 = vpack.c.b16 %v1103, %v1102
    %v1114 = vpack.c.b16 %v1105, %v1104
    %v1115 = vpack.c.b16 %v1107, %v1106
    %1124 = vmatprep.subr.bf16.mxu0 0
    %1125 = vmatpush1.bf16.msra.mxu0 %v1115
    %1126 = vmatprep.subr.bf16.mxu0 0
    %1127 = vmatpush1.bf16.msra.mxu0 %v1114
    %1128 = vmatprep.subr.bf16.mxu0 0
    %1129 = vmatpush1.bf16.msra.mxu0 %v1113
    %1130 = vmatprep.subr.bf16.mxu0 0
    %1131 = vmatpush1.bf16.msra.mxu0 %v1112
    %1132 = vmatprep.subr.bf16.mxu0 0
    %1133 = vmatpush1.bf16.msra.mxu0 %v1111
    %1134 = vmatprep.subr.bf16.mxu0 0
    %1135 = vmatpush1.bf16.msra.mxu0 %v1110
    %1136 = vmatprep.subr.bf16.mxu0 0
    %1137 = vmatpush1.bf16.msra.mxu0 %v1109
    %1138 = vmatprep.subr.bf16.mxu0 0
    %1139 = vmatpush1.bf16.msra.mxu0 %v1108
    %1140 = vmatprep.subr.bf16.mxu0 0
    %1141 = vmatpush2.bf16.msra.mxu0 0
    %1142 = vmatprep.subr.bf16.mxu0 0
    %1143 = vmatpush2.bf16.msra.mxu0 0
    %1144 = vmatprep.subr.bf16.mxu0 0
    %1145 = vmatpush2.bf16.msra.mxu0 0
    %1146 = vmatprep.subr.bf16.mxu0 0
    %1147 = vmatpush2.bf16.msra.mxu0 0
    %1148 = vmatprep.subr.bf16.mxu0 0
    %1149 = vmatpush2.bf16.msra.mxu0 0
    %1150 = vmatprep.subr.bf16.mxu0 0
    %1151 = vmatpush2.bf16.msra.mxu0 0
    %1152 = vmatprep.subr.bf16.mxu0 0
    %1153 = vmatpush2.bf16.msra.mxu0 0
    %1154 = vmatprep.subr.bf16.mxu0 0
    %1155 = vmatpush2.bf16.msra.mxu0 0
    %1156 = vmatprep.mubr.bf16.mxu0 0
    %1157 = vmatmul.mubr.bf16.gmra.mxu0 %v820
    %v1158 = vpop.f32.mrf.mxu0
    %v1159 = vadd.f32 0.0, %v1158
    %v1160 = vpop.f32.mrf.mxu0
    %v1161 = vpop.f32.mrf.mxu0
    %v1162 = vadd.f32 0.0, %v1161
    %v1163 = vpop.f32.mrf.mxu0
    %1164 = vmatprep.mubr.bf16.mxu0 0
    %1165 = vmatmul.mubr.bf16.gmra.mxu0 %v821
    %v1166 = vpop.f32.mrf.mxu0
    %v1167 = vadd.f32 0.0, %v1166
    %v1168 = vpop.f32.mrf.mxu0
    %v1169 = vpop.f32.mrf.mxu0
    %v1170 = vadd.f32 0.0, %v1169
    %v1171 = vpop.f32.mrf.mxu0
    %1172 = vmatprep.mubr.bf16.mxu0 0
    %1173 = vmatmul.mubr.bf16.gmra.mxu0 %v822
    %v1174 = vpop.f32.mrf.mxu0
    %v1175 = vadd.f32 0.0, %v1174
    %v1176 = vpop.f32.mrf.mxu0
    %v1177 = vpop.f32.mrf.mxu0
    %v1178 = vadd.f32 0.0, %v1177
    %v1179 = vpop.f32.mrf.mxu0
    %1180 = vmatprep.mubr.bf16.mxu0 0
    %1181 = vmatmul.mubr.bf16.gmra.mxu0 %v823
    %v1182 = vpop.f32.mrf.mxu0
    %v1183 = vadd.f32 0.0, %v1182
    %v1184 = vpop.f32.mrf.mxu0
    %v1185 = vpop.f32.mrf.mxu0
    %v1186 = vadd.f32 0.0, %v1185
    %v1187 = vpop.f32.mrf.mxu0
    %1188 = vmatprep.mubr.bf16.mxu0 0
    %1189 = vmatmul.mubr.bf16.gmra.mxu0 %v824
    %v1190 = vpop.f32.mrf.mxu0
    %v1191 = vadd.f32 0.0, %v1190
    %v1192 = vpop.f32.mrf.mxu0
    %v1193 = vpop.f32.mrf.mxu0
    %v1194 = vadd.f32 0.0, %v1193
    %v1195 = vpop.f32.mrf.mxu0
    %1196 = vmatprep.mubr.bf16.mxu0 0
    %1197 = vmatmul.mubr.bf16.gmra.mxu0 %v825
    %v1198 = vpop.f32.mrf.mxu0
    %v1199 = vadd.f32 0.0, %v1198
    %v1200 = vpop.f32.mrf.mxu0
    %v1201 = vpop.f32.mrf.mxu0
    %v1202 = vadd.f32 0.0, %v1201
    %v1203 = vpop.f32.mrf.mxu0
    %1204 = vmatprep.mubr.bf16.mxu0 0
    %1205 = vmatmul.mubr.bf16.gmra.mxu0 %v826
    %v1206 = vpop.f32.mrf.mxu0
    %v1207 = vadd.f32 0.0, %v1206
    %v1208 = vpop.f32.mrf.mxu0
    %v1209 = vpop.f32.mrf.mxu0
    %v1210 = vadd.f32 0.0, %v1209
    %v1211 = vpop.f32.mrf.mxu0
    %1212 = vmatprep.mubr.bf16.mxu0 0
    %1213 = vmatmul.mubr.bf16.gmra.mxu0 %v827
    %v1214 = vpop.f32.mrf.mxu0
    %v1215 = vadd.f32 0.0, %v1214
    %v1216 = vpop.f32.mrf.mxu0
    %v1217 = vpop.f32.mrf.mxu0
    %v1218 = vadd.f32 0.0, %v1217
    %v1219 = vpop.f32.mrf.mxu0
    %1220 = vmatprep.mubr.bf16.mxu0 0
    %1221 = vmatmul.mubr.bf16.gmra.mxu0 %v828
    %v1222 = vpop.f32.mrf.mxu0
    %v1223 = vadd.f32 0.0, %v1222
    %v1224 = vpop.f32.mrf.mxu0
    %v1225 = vpop.f32.mrf.mxu0
    %v1226 = vadd.f32 0.0, %v1225
    %v1227 = vpop.f32.mrf.mxu0
    %1228 = vmatprep.mubr.bf16.mxu0 0
    %1229 = vmatmul.mubr.bf16.gmra.mxu0 %v829
    %v1230 = vpop.f32.mrf.mxu0
    %v1231 = vadd.f32 0.0, %v1230
    %v1232 = vpop.f32.mrf.mxu0
    %v1233 = vpop.f32.mrf.mxu0
    %v1234 = vadd.f32 0.0, %v1233
    %v1235 = vpop.f32.mrf.mxu0
    %1236 = vmatprep.mubr.bf16.mxu0 0
    %1237 = vmatmul.mubr.bf16.gmra.mxu0 %v830
    %v1238 = vpop.f32.mrf.mxu0
    %v1239 = vadd.f32 0.0, %v1238
    %v1240 = vpop.f32.mrf.mxu0
    %v1241 = vpop.f32.mrf.mxu0
    %v1242 = vadd.f32 0.0, %v1241
    %v1243 = vpop.f32.mrf.mxu0
    %1244 = vmatprep.mubr.bf16.mxu0 0
    %1245 = vmatmul.mubr.bf16.gmra.mxu0 %v831
    %v1246 = vpop.f32.mrf.mxu0
    %v1247 = vadd.f32 0.0, %v1246
    %v1248 = vpop.f32.mrf.mxu0
    %v1249 = vpop.f32.mrf.mxu0
    %v1250 = vadd.f32 0.0, %v1249
    %v1251 = vpop.f32.mrf.mxu0
    %1252 = vmatprep.mubr.bf16.mxu0 0
    %1253 = vmatmul.mubr.bf16.gmra.mxu0 %v832
    %v1254 = vpop.f32.mrf.mxu0
    %v1255 = vadd.f32 0.0, %v1254
    %v1256 = vpop.f32.mrf.mxu0
    %v1257 = vpop.f32.mrf.mxu0
    %v1258 = vadd.f32 0.0, %v1257
    %v1259 = vpop.f32.mrf.mxu0
    %1260 = vmatprep.mubr.bf16.mxu0 0
    %1261 = vmatmul.mubr.bf16.gmra.mxu0 %v833
    %v1262 = vpop.f32.mrf.mxu0
    %v1263 = vadd.f32 0.0, %v1262
    %v1264 = vpop.f32.mrf.mxu0
    %v1265 = vpop.f32.mrf.mxu0
    %v1266 = vadd.f32 0.0, %v1265
    %v1267 = vpop.f32.mrf.mxu0
    %1268 = vmatprep.mubr.bf16.mxu0 0
    %1269 = vmatmul.mubr.bf16.gmra.mxu0 %v834
    %v1270 = vpop.f32.mrf.mxu0
    %v1271 = vadd.f32 0.0, %v1270
    %v1272 = vpop.f32.mrf.mxu0
    %v1273 = vpop.f32.mrf.mxu0
    %v1274 = vadd.f32 0.0, %v1273
    %v1275 = vpop.f32.mrf.mxu0
    %1276 = vmatprep.mubr.bf16.mxu0 0
    %1277 = vmatmul.mubr.bf16.gmra.mxu0 %v835
    %v1278 = vpop.f32.mrf.mxu0
    %v1279 = vadd.f32 0.0, %v1278
    %v1280 = vpop.f32.mrf.mxu0
    %v1281 = vpop.f32.mrf.mxu0
    %v1282 = vadd.f32 0.0, %v1281
    %v1283 = vpop.f32.mrf.mxu0
    %1284 = vmatprep.mubr.bf16.mxu0 0
    %1285 = vmatmul.mubr.bf16.gmra.mxu0 %v836
    %v1286 = vpop.f32.mrf.mxu0
    %v1287 = vadd.f32 0.0, %v1286
    %v1288 = vpop.f32.mrf.mxu0
    %v1289 = vpop.f32.mrf.mxu0
    %v1290 = vadd.f32 0.0, %v1289
    %v1291 = vpop.f32.mrf.mxu0
    %1292 = vmatprep.mubr.bf16.mxu0 0
    %1293 = vmatmul.mubr.bf16.gmra.mxu0 %v837
    %v1294 = vpop.f32.mrf.mxu0
    %v1295 = vadd.f32 0.0, %v1294
    %v1296 = vpop.f32.mrf.mxu0
    %v1297 = vpop.f32.mrf.mxu0
    %v1298 = vadd.f32 0.0, %v1297
    %v1299 = vpop.f32.mrf.mxu0
    %1300 = vmatprep.mubr.bf16.mxu0 0
    %1301 = vmatmul.mubr.bf16.gmra.mxu0 %v838
    %v1302 = vpop.f32.mrf.mxu0
    %v1303 = vadd.f32 0.0, %v1302
    %v1304 = vpop.f32.mrf.mxu0
    %v1305 = vpop.f32.mrf.mxu0
    %v1306 = vadd.f32 0.0, %v1305
    %v1307 = vpop.f32.mrf.mxu0
    %1308 = vmatprep.mubr.bf16.mxu0 0
    %1309 = vmatmul.mubr.bf16.gmra.mxu0 %v839
    %v1310 = vpop.f32.mrf.mxu0
    %v1311 = vadd.f32 0.0, %v1310
    %v1312 = vpop.f32.mrf.mxu0
    %v1313 = vpop.f32.mrf.mxu0
    %v1314 = vadd.f32 0.0, %v1313
    %v1315 = vpop.f32.mrf.mxu0
    %1316 = vmatprep.mubr.bf16.mxu0 0
    %1317 = vmatmul.mubr.bf16.gmra.mxu0 %v840
    %v1318 = vpop.f32.mrf.mxu0
    %v1319 = vadd.f32 0.0, %v1318
    %v1320 = vpop.f32.mrf.mxu0
    %v1321 = vpop.f32.mrf.mxu0
    %v1322 = vadd.f32 0.0, %v1321
    %v1323 = vpop.f32.mrf.mxu0
    %1324 = vmatprep.mubr.bf16.mxu0 0
    %1325 = vmatmul.mubr.bf16.gmra.mxu0 %v841
    %v1326 = vpop.f32.mrf.mxu0
    %v1327 = vadd.f32 0.0, %v1326
    %v1328 = vpop.f32.mrf.mxu0
    %v1329 = vpop.f32.mrf.mxu0
    %v1330 = vadd.f32 0.0, %v1329
    %v1331 = vpop.f32.mrf.mxu0
    %1332 = vmatprep.mubr.bf16.mxu0 0
    %1333 = vmatmul.mubr.bf16.gmra.mxu0 %v842
    %v1334 = vpop.f32.mrf.mxu0
    %v1335 = vadd.f32 0.0, %v1334
    %v1336 = vpop.f32.mrf.mxu0
    %v1337 = vpop.f32.mrf.mxu0
    %v1338 = vadd.f32 0.0, %v1337
    %v1339 = vpop.f32.mrf.mxu0
    %1340 = vmatprep.mubr.bf16.mxu0 0
    %1341 = vmatmul.mubr.bf16.gmra.mxu0 %v843
    %v1342 = vpop.f32.mrf.mxu0
    %v1343 = vadd.f32 0.0, %v1342
    %v1344 = vpop.f32.mrf.mxu0
    %v1345 = vpop.f32.mrf.mxu0
    %v1346 = vadd.f32 0.0, %v1345
    %v1347 = vpop.f32.mrf.mxu0
    %1348 = vmatprep.mubr.bf16.mxu0 0
    %1349 = vmatmul.mubr.bf16.gmra.mxu0 %v844
    %v1350 = vpop.f32.mrf.mxu0
    %v1351 = vadd.f32 0.0, %v1350
    %v1352 = vpop.f32.mrf.mxu0
    %v1353 = vpop.f32.mrf.mxu0
    %v1354 = vadd.f32 0.0, %v1353
    %v1355 = vpop.f32.mrf.mxu0
    %1356 = vmatprep.mubr.bf16.mxu0 0
    %1357 = vmatmul.mubr.bf16.gmra.mxu0 %v845
    %v1358 = vpop.f32.mrf.mxu0
    %v1359 = vadd.f32 0.0, %v1358
    %v1360 = vpop.f32.mrf.mxu0
    %v1361 = vpop.f32.mrf.mxu0
    %v1362 = vadd.f32 0.0, %v1361
    %v1363 = vpop.f32.mrf.mxu0
    %1364 = vmatprep.mubr.bf16.mxu0 0
    %1365 = vmatmul.mubr.bf16.gmra.mxu0 %v846
    %v1366 = vpop.f32.mrf.mxu0
    %v1367 = vadd.f32 0.0, %v1366
    %v1368 = vpop.f32.mrf.mxu0
    %v1369 = vpop.f32.mrf.mxu0
    %v1370 = vadd.f32 0.0, %v1369
    %v1371 = vpop.f32.mrf.mxu0
    %1372 = vmatprep.mubr.bf16.mxu0 0
    %1373 = vmatmul.mubr.bf16.gmra.mxu0 %v847
    %v1374 = vpop.f32.mrf.mxu0
    %v1375 = vadd.f32 0.0, %v1374
    %v1376 = vpop.f32.mrf.mxu0
    %v1377 = vpop.f32.mrf.mxu0
    %v1378 = vadd.f32 0.0, %v1377
    %v1379 = vpop.f32.mrf.mxu0
    %1380 = vmatprep.mubr.bf16.mxu0 0
    %1381 = vmatmul.mubr.bf16.gmra.mxu0 %v848
    %v1382 = vpop.f32.mrf.mxu0
    %v1383 = vadd.f32 0.0, %v1382
    %v1384 = vpop.f32.mrf.mxu0
    %v1385 = vpop.f32.mrf.mxu0
    %v1386 = vadd.f32 0.0, %v1385
    %v1387 = vpop.f32.mrf.mxu0
    %1388 = vmatprep.mubr.bf16.mxu0 0
    %1389 = vmatmul.mubr.bf16.gmra.mxu0 %v849
    %v1390 = vpop.f32.mrf.mxu0
    %v1391 = vadd.f32 0.0, %v1390
    %v1392 = vpop.f32.mrf.mxu0
    %v1393 = vpop.f32.mrf.mxu0
    %v1394 = vadd.f32 0.0, %v1393
    %v1395 = vpop.f32.mrf.mxu0
    %1396 = vmatprep.mubr.bf16.mxu0 0
    %1397 = vmatmul.mubr.bf16.gmra.mxu0 %v850
    %v1398 = vpop.f32.mrf.mxu0
    %v1399 = vadd.f32 0.0, %v1398
    %v1400 = vpop.f32.mrf.mxu0
    %v1401 = vpop.f32.mrf.mxu0
    %v1402 = vadd.f32 0.0, %v1401
    %v1403 = vpop.f32.mrf.mxu0
    %1404 = vmatprep.mubr.bf16.mxu0 0
    %1405 = vmatmul.mubr.bf16.gmra.mxu0 %v851
    %v1406 = vpop.f32.mrf.mxu0
    %v1407 = vadd.f32 0.0, %v1406
    %v1408 = vpop.f32.mrf.mxu0
    %v1409 = vpop.f32.mrf.mxu0
    %v1410 = vadd.f32 0.0, %v1409
    %v1411 = vpop.f32.mrf.mxu0
    %1412 = vmatprep.mubr.bf16.mxu0 0
    %1413 = vmatmul.mubr.bf16.gmra.mxu0 %v852
    %v1414 = vpop.f32.mrf.mxu0
    %v1415 = vadd.f32 0.0, %v1414
    %v1416 = vpop.f32.mrf.mxu0
    %v1417 = vpop.f32.mrf.mxu0
    %v1418 = vadd.f32 0.0, %v1417
    %v1419 = vpop.f32.mrf.mxu0
    %1420 = vmatprep.mubr.bf16.mxu0 0
    %1421 = vmatmul.mubr.bf16.gmra.mxu0 %v853
    %v1422 = vpop.f32.mrf.mxu0
    %v1423 = vadd.f32 0.0, %v1422
    %v1424 = vpop.f32.mrf.mxu0
    %v1425 = vpop.f32.mrf.mxu0
    %v1426 = vadd.f32 0.0, %v1425
    %v1427 = vpop.f32.mrf.mxu0
    %1428 = vmatprep.mubr.bf16.mxu0 0
    %1429 = vmatmul.mubr.bf16.gmra.mxu0 %v854
    %v1430 = vpop.f32.mrf.mxu0
    %v1431 = vadd.f32 0.0, %v1430
    %v1432 = vpop.f32.mrf.mxu0
    %v1433 = vpop.f32.mrf.mxu0
    %v1434 = vadd.f32 0.0, %v1433
    %v1435 = vpop.f32.mrf.mxu0
    %1436 = vmatprep.mubr.bf16.mxu0 0
    %1437 = vmatmul.mubr.bf16.gmra.mxu0 %v855
    %v1438 = vpop.f32.mrf.mxu0
    %v1439 = vadd.f32 0.0, %v1438
    %v1440 = vpop.f32.mrf.mxu0
    %v1441 = vpop.f32.mrf.mxu0
    %v1442 = vadd.f32 0.0, %v1441
    %v1443 = vpop.f32.mrf.mxu0
    %1444 = vmatprep.mubr.bf16.mxu0 0
    %1445 = vmatmul.mubr.bf16.gmra.mxu0 %v856
    %v1446 = vpop.f32.mrf.mxu0
    %v1447 = vadd.f32 0.0, %v1446
    %v1448 = vpop.f32.mrf.mxu0
    %v1449 = vpop.f32.mrf.mxu0
    %v1450 = vadd.f32 0.0, %v1449
    %v1451 = vpop.f32.mrf.mxu0
    %1452 = vmatprep.mubr.bf16.mxu0 0
    %1453 = vmatmul.mubr.bf16.gmra.mxu0 %v857
    %v1454 = vpop.f32.mrf.mxu0
    %v1455 = vadd.f32 0.0, %v1454
    %v1456 = vpop.f32.mrf.mxu0
    %v1457 = vpop.f32.mrf.mxu0
    %v1458 = vadd.f32 0.0, %v1457
    %v1459 = vpop.f32.mrf.mxu0
    %1460 = vmatprep.mubr.bf16.mxu0 0
    %1461 = vmatmul.mubr.bf16.gmra.mxu0 %v858
    %v1462 = vpop.f32.mrf.mxu0
    %v1463 = vadd.f32 0.0, %v1462
    %v1464 = vpop.f32.mrf.mxu0
    %v1465 = vpop.f32.mrf.mxu0
    %v1466 = vadd.f32 0.0, %v1465
    %v1467 = vpop.f32.mrf.mxu0
    %1468 = vmatprep.mubr.bf16.mxu0 0
    %1469 = vmatmul.mubr.bf16.gmra.mxu0 %v859
    %v1470 = vpop.f32.mrf.mxu0
    %v1471 = vadd.f32 0.0, %v1470
    %v1472 = vpop.f32.mrf.mxu0
    %v1473 = vpop.f32.mrf.mxu0
    %v1474 = vadd.f32 0.0, %v1473
    %v1475 = vpop.f32.mrf.mxu0
    %1476 = vmatprep.mubr.bf16.mxu0 0
    %1477 = vmatmul.mubr.bf16.gmra.mxu0 %v860
    %v1478 = vpop.f32.mrf.mxu0
    %v1479 = vadd.f32 0.0, %v1478
    %v1480 = vpop.f32.mrf.mxu0
    %v1481 = vpop.f32.mrf.mxu0
    %v1482 = vadd.f32 0.0, %v1481
    %v1483 = vpop.f32.mrf.mxu0
    %1484 = vmatprep.mubr.bf16.mxu0 0
    %1485 = vmatmul.mubr.bf16.gmra.mxu0 %v861
    %v1486 = vpop.f32.mrf.mxu0
    %v1487 = vadd.f32 0.0, %v1486
    %v1488 = vpop.f32.mrf.mxu0
    %v1489 = vpop.f32.mrf.mxu0
    %v1490 = vadd.f32 0.0, %v1489
    %v1491 = vpop.f32.mrf.mxu0
    %1492 = vmatprep.mubr.bf16.mxu0 0
    %1493 = vmatmul.mubr.bf16.gmra.mxu0 %v862
    %v1494 = vpop.f32.mrf.mxu0
    %v1495 = vadd.f32 0.0, %v1494
    %v1496 = vpop.f32.mrf.mxu0
    %v1497 = vpop.f32.mrf.mxu0
    %v1498 = vadd.f32 0.0, %v1497
    %v1499 = vpop.f32.mrf.mxu0
    %1500 = vmatprep.mubr.bf16.mxu0 0
    %1501 = vmatmul.mubr.bf16.gmra.mxu0 %v863
    %v1502 = vpop.f32.mrf.mxu0
    %v1503 = vadd.f32 0.0, %v1502
    %v1504 = vpop.f32.mrf.mxu0
    %v1505 = vpop.f32.mrf.mxu0
    %v1506 = vadd.f32 0.0, %v1505
    %v1507 = vpop.f32.mrf.mxu0
    %1508 = vmatprep.mubr.bf16.mxu0 0
    %1509 = vmatmul.mubr.bf16.gmra.mxu0 %v864
    %v1510 = vpop.f32.mrf.mxu0
    %v1511 = vadd.f32 0.0, %v1510
    %v1512 = vpop.f32.mrf.mxu0
    %v1513 = vpop.f32.mrf.mxu0
    %v1514 = vadd.f32 0.0, %v1513
    %v1515 = vpop.f32.mrf.mxu0
    %1516 = vmatprep.mubr.bf16.mxu0 0
    %1517 = vmatmul.mubr.bf16.gmra.mxu0 %v865
    %v1518 = vpop.f32.mrf.mxu0
    %v1519 = vadd.f32 0.0, %v1518
    %v1520 = vpop.f32.mrf.mxu0
    %v1521 = vpop.f32.mrf.mxu0
    %v1522 = vadd.f32 0.0, %v1521
    %v1523 = vpop.f32.mrf.mxu0
    %1524 = vmatprep.mubr.bf16.mxu0 0
    %1525 = vmatmul.mubr.bf16.gmra.mxu0 %v866
    %v1526 = vpop.f32.mrf.mxu0
    %v1527 = vadd.f32 0.0, %v1526
    %v1528 = vpop.f32.mrf.mxu0
    %v1529 = vpop.f32.mrf.mxu0
    %v1530 = vadd.f32 0.0, %v1529
    %v1531 = vpop.f32.mrf.mxu0
    %1532 = vmatprep.mubr.bf16.mxu0 0
    %1533 = vmatmul.mubr.bf16.gmra.mxu0 %v867
    %v1534 = vpop.f32.mrf.mxu0
    %v1535 = vadd.f32 0.0, %v1534
    %v1536 = vpop.f32.mrf.mxu0
    %v1537 = vpop.f32.mrf.mxu0
    %v1538 = vadd.f32 0.0, %v1537
    %v1539 = vpop.f32.mrf.mxu0
    %1540 = vmatprep.mubr.bf16.mxu0 0
    %1541 = vmatmul.mubr.bf16.gmra.mxu0 %v868
    %v1542 = vpop.f32.mrf.mxu0
    %v1543 = vadd.f32 0.0, %v1542
    %v1544 = vpop.f32.mrf.mxu0
    %v1545 = vpop.f32.mrf.mxu0
    %v1546 = vadd.f32 0.0, %v1545
    %v1547 = vpop.f32.mrf.mxu0
    %1548 = vmatprep.mubr.bf16.mxu0 0
    %1549 = vmatmul.mubr.bf16.gmra.mxu0 %v869
    %v1550 = vpop.f32.mrf.mxu0
    %v1551 = vadd.f32 0.0, %v1550
    %v1552 = vpop.f32.mrf.mxu0
    %v1553 = vpop.f32.mrf.mxu0
    %v1554 = vadd.f32 0.0, %v1553
    %v1555 = vpop.f32.mrf.mxu0
    %1556 = vmatprep.mubr.bf16.mxu0 0
    %1557 = vmatmul.mubr.bf16.gmra.mxu0 %v870
    %v1558 = vpop.f32.mrf.mxu0
    %v1559 = vadd.f32 0.0, %v1558
    %v1560 = vpop.f32.mrf.mxu0
    %v1561 = vpop.f32.mrf.mxu0
    %v1562 = vadd.f32 0.0, %v1561
    %v1563 = vpop.f32.mrf.mxu0
    %1564 = vmatprep.mubr.bf16.mxu0 0
    %1565 = vmatmul.mubr.bf16.gmra.mxu0 %v871
    %v1566 = vpop.f32.mrf.mxu0
    %v1567 = vadd.f32 0.0, %v1566
    %v1568 = vpop.f32.mrf.mxu0
    %v1569 = vpop.f32.mrf.mxu0
    %v1570 = vadd.f32 0.0, %v1569
    %v1571 = vpop.f32.mrf.mxu0
    %1572 = vmatprep.mubr.bf16.mxu0 0
    %1573 = vmatmul.mubr.bf16.gmra.mxu0 %v872
    %v1574 = vpop.f32.mrf.mxu0
    %v1575 = vadd.f32 0.0, %v1574
    %v1576 = vpop.f32.mrf.mxu0
    %v1577 = vpop.f32.mrf.mxu0
    %v1578 = vadd.f32 0.0, %v1577
    %v1579 = vpop.f32.mrf.mxu0
    %1580 = vmatprep.mubr.bf16.mxu0 0
    %1581 = vmatmul.mubr.bf16.gmra.mxu0 %v873
    %v1582 = vpop.f32.mrf.mxu0
    %v1583 = vadd.f32 0.0, %v1582
    %v1584 = vpop.f32.mrf.mxu0
    %v1585 = vpop.f32.mrf.mxu0
    %v1586 = vadd.f32 0.0, %v1585
    %v1587 = vpop.f32.mrf.mxu0
    %1588 = vmatprep.mubr.bf16.mxu0 0
    %1589 = vmatmul.mubr.bf16.gmra.mxu0 %v874
    %v1590 = vpop.f32.mrf.mxu0
    %v1591 = vadd.f32 0.0, %v1590
    %v1592 = vpop.f32.mrf.mxu0
    %v1593 = vpop.f32.mrf.mxu0
    %v1594 = vadd.f32 0.0, %v1593
    %v1595 = vpop.f32.mrf.mxu0
    %1596 = vmatprep.mubr.bf16.mxu0 0
    %1597 = vmatmul.mubr.bf16.gmra.mxu0 %v875
    %v1598 = vpop.f32.mrf.mxu0
    %v1599 = vadd.f32 0.0, %v1598
    %v1600 = vpop.f32.mrf.mxu0
    %v1601 = vpop.f32.mrf.mxu0
    %v1602 = vadd.f32 0.0, %v1601
    %v1603 = vpop.f32.mrf.mxu0
    %1604 = vmatprep.mubr.bf16.mxu0 0
    %1605 = vmatmul.mubr.bf16.gmra.mxu0 %v876
    %v1606 = vpop.f32.mrf.mxu0
    %v1607 = vadd.f32 0.0, %v1606
    %v1608 = vpop.f32.mrf.mxu0
    %v1609 = vpop.f32.mrf.mxu0
    %v1610 = vadd.f32 0.0, %v1609
    %v1611 = vpop.f32.mrf.mxu0
    %1612 = vmatprep.mubr.bf16.mxu0 0
    %1613 = vmatmul.mubr.bf16.gmra.mxu0 %v877
    %v1614 = vpop.f32.mrf.mxu0
    %v1615 = vadd.f32 0.0, %v1614
    %v1616 = vpop.f32.mrf.mxu0
    %v1617 = vpop.f32.mrf.mxu0
    %v1618 = vadd.f32 0.0, %v1617
    %v1619 = vpop.f32.mrf.mxu0
    %1620 = vmatprep.mubr.bf16.mxu0 0
    %1621 = vmatmul.mubr.bf16.gmra.mxu0 %v878
    %v1622 = vpop.f32.mrf.mxu0
    %v1623 = vadd.f32 0.0, %v1622
    %v1624 = vpop.f32.mrf.mxu0
    %v1625 = vpop.f32.mrf.mxu0
    %v1626 = vadd.f32 0.0, %v1625
    %v1627 = vpop.f32.mrf.mxu0
    %1628 = vmatprep.mubr.bf16.mxu0 0
    %1629 = vmatmul.mubr.bf16.gmra.mxu0 %v879
    %v1630 = vpop.f32.mrf.mxu0
    %v1631 = vadd.f32 0.0, %v1630
    %v1632 = vpop.f32.mrf.mxu0
    %v1633 = vpop.f32.mrf.mxu0
    %v1634 = vadd.f32 0.0, %v1633
    %v1635 = vpop.f32.mrf.mxu0
    %1636 = vmatprep.mubr.bf16.mxu0 0
    %1637 = vmatmul.mubr.bf16.gmra.mxu0 %v880
    %v1638 = vpop.f32.mrf.mxu0
    %v1639 = vadd.f32 0.0, %v1638
    %v1640 = vpop.f32.mrf.mxu0
    %v1641 = vpop.f32.mrf.mxu0
    %v1642 = vadd.f32 0.0, %v1641
    %v1643 = vpop.f32.mrf.mxu0
    %1644 = vmatprep.mubr.bf16.mxu0 0
    %1645 = vmatmul.mubr.bf16.gmra.mxu0 %v881
    %v1646 = vpop.f32.mrf.mxu0
    %v1647 = vadd.f32 0.0, %v1646
    %v1648 = vpop.f32.mrf.mxu0
    %v1649 = vpop.f32.mrf.mxu0
    %v1650 = vadd.f32 0.0, %v1649
    %v1651 = vpop.f32.mrf.mxu0
    %1652 = vmatprep.mubr.bf16.mxu0 0
    %1653 = vmatmul.mubr.bf16.gmra.mxu0 %v882
    %v1654 = vpop.f32.mrf.mxu0
    %v1655 = vadd.f32 0.0, %v1654
    %v1656 = vpop.f32.mrf.mxu0
    %v1657 = vpop.f32.mrf.mxu0
    %v1658 = vadd.f32 0.0, %v1657
    %v1659 = vpop.f32.mrf.mxu0
    %1660 = vmatprep.mubr.bf16.mxu0 0
    %1661 = vmatmul.mubr.bf16.gmra.mxu0 %v883
    %v1662 = vpop.f32.mrf.mxu0
    %v1663 = vadd.f32 0.0, %v1662
    %v1664 = vpop.f32.mrf.mxu0
    %v1665 = vpop.f32.mrf.mxu0
    %v1666 = vadd.f32 0.0, %v1665
    %v1667 = vpop.f32.mrf.mxu0
    %1668 = vmatprep.mubr.bf16.mxu0 0
    %1669 = vmatmul.mubr.bf16.gmra.mxu0 %v884
    %v1670 = vpop.f32.mrf.mxu0
    %v1671 = vadd.f32 0.0, %v1670
    %v1672 = vpop.f32.mrf.mxu0
    %v1673 = vpop.f32.mrf.mxu0
    %v1674 = vadd.f32 0.0, %v1673
    %v1675 = vpop.f32.mrf.mxu0
    %1676 = vmatprep.mubr.bf16.mxu0 0
    %1677 = vmatmul.mubr.bf16.gmra.mxu0 %v885
    %v1678 = vpop.f32.mrf.mxu0
    %v1679 = vadd.f32 0.0, %v1678
    %v1680 = vpop.f32.mrf.mxu0
    %v1681 = vpop.f32.mrf.mxu0
    %v1682 = vadd.f32 0.0, %v1681
    %v1683 = vpop.f32.mrf.mxu0
    %1684 = vmatprep.mubr.bf16.mxu0 0
    %1685 = vmatmul.mubr.bf16.gmra.mxu0 %v886
    %v1686 = vpop.f32.mrf.mxu0
    %v1687 = vadd.f32 0.0, %v1686
    %v1688 = vpop.f32.mrf.mxu0
    %v1689 = vpop.f32.mrf.mxu0
    %v1690 = vadd.f32 0.0, %v1689
    %v1691 = vpop.f32.mrf.mxu0
    %1692 = vmatprep.mubr.bf16.mxu0 0
    %1693 = vmatmul.mubr.bf16.gmra.mxu0 %v887
    %v1694 = vpop.f32.mrf.mxu0
    %v1695 = vadd.f32 0.0, %v1694
    %v1696 = vpop.f32.mrf.mxu0
    %v1697 = vpop.f32.mrf.mxu0
    %v1698 = vadd.f32 0.0, %v1697
    %v1699 = vpop.f32.mrf.mxu0
    %1700 = vmatprep.mubr.bf16.mxu0 0
    %1701 = vmatmul.mubr.bf16.gmra.mxu0 %v888
    %v1702 = vpop.f32.mrf.mxu0
    %v1703 = vadd.f32 0.0, %v1702
    %v1704 = vpop.f32.mrf.mxu0
    %v1705 = vpop.f32.mrf.mxu0
    %v1706 = vadd.f32 0.0, %v1705
    %v1707 = vpop.f32.mrf.mxu0
    %1708 = vmatprep.mubr.bf16.mxu0 0
    %1709 = vmatmul.mubr.bf16.gmra.mxu0 %v889
    %v1710 = vpop.f32.mrf.mxu0
    %v1711 = vadd.f32 0.0, %v1710
    %v1712 = vpop.f32.mrf.mxu0
    %v1713 = vpop.f32.mrf.mxu0
    %v1714 = vadd.f32 0.0, %v1713
    %v1715 = vpop.f32.mrf.mxu0
    %1716 = vmatprep.mubr.bf16.mxu0 0
    %1717 = vmatmul.mubr.bf16.gmra.mxu0 %v890
    %v1718 = vpop.f32.mrf.mxu0
    %v1719 = vadd.f32 0.0, %v1718
    %v1720 = vpop.f32.mrf.mxu0
    %v1721 = vpop.f32.mrf.mxu0
    %v1722 = vadd.f32 0.0, %v1721
    %v1723 = vpop.f32.mrf.mxu0
    %1724 = vmatprep.mubr.bf16.mxu0 0
    %1725 = vmatmul.mubr.bf16.gmra.mxu0 %v891
    %v1726 = vpop.f32.mrf.mxu0
    %v1727 = vadd.f32 0.0, %v1726
    %v1728 = vpop.f32.mrf.mxu0
    %v1729 = vpop.f32.mrf.mxu0
    %v1730 = vadd.f32 0.0, %v1729
    %v1731 = vpop.f32.mrf.mxu0
    %1732 = vmatprep.mubr.bf16.mxu0 0
    %1733 = vmatmul.mubr.bf16.gmra.mxu0 %v892
    %v1734 = vpop.f32.mrf.mxu0
    %v1735 = vadd.f32 0.0, %v1734
    %v1736 = vpop.f32.mrf.mxu0
    %v1737 = vpop.f32.mrf.mxu0
    %v1738 = vadd.f32 0.0, %v1737
    %v1739 = vpop.f32.mrf.mxu0
    %1740 = vmatprep.mubr.bf16.mxu0 0
    %1741 = vmatmul.mubr.bf16.gmra.mxu0 %v893
    %v1742 = vpop.f32.mrf.mxu0
    %v1743 = vadd.f32 0.0, %v1742
    %v1744 = vpop.f32.mrf.mxu0
    %v1745 = vpop.f32.mrf.mxu0
    %v1746 = vadd.f32 0.0, %v1745
    %v1747 = vpop.f32.mrf.mxu0
    %1748 = vmatprep.mubr.bf16.mxu0 0
    %1749 = vmatmul.mubr.bf16.gmra.mxu0 %v894
    %v1750 = vpop.f32.mrf.mxu0
    %v1751 = vadd.f32 0.0, %v1750
    %v1752 = vpop.f32.mrf.mxu0
    %v1753 = vpop.f32.mrf.mxu0
    %v1754 = vadd.f32 0.0, %v1753
    %v1755 = vpop.f32.mrf.mxu0
    %1756 = vmatprep.mubr.bf16.mxu0 0
    %1757 = vmatmul.mubr.bf16.gmra.mxu0 %v895
    %v1758 = vpop.f32.mrf.mxu0
    %v1759 = vadd.f32 0.0, %v1758
    %v1760 = vpop.f32.mrf.mxu0
    %v1761 = vpop.f32.mrf.mxu0
    %v1762 = vadd.f32 0.0, %v1761
    %v1763 = vpop.f32.mrf.mxu0
    %1764 = vmatprep.mubr.bf16.mxu0 0
    %1765 = vmatmul.mubr.bf16.gmra.mxu0 %v896
    %v1766 = vpop.f32.mrf.mxu0
    %v1767 = vadd.f32 0.0, %v1766
    %v1768 = vpop.f32.mrf.mxu0
    %v1769 = vpop.f32.mrf.mxu0
    %v1770 = vadd.f32 0.0, %v1769
    %v1771 = vpop.f32.mrf.mxu0
    %1772 = vmatprep.mubr.bf16.mxu0 0
    %1773 = vmatmul.mubr.bf16.gmra.mxu0 %v897
    %v1774 = vpop.f32.mrf.mxu0
    %v1775 = vadd.f32 0.0, %v1774
    %v1776 = vpop.f32.mrf.mxu0
    %v1777 = vpop.f32.mrf.mxu0
    %v1778 = vadd.f32 0.0, %v1777
    %v1779 = vpop.f32.mrf.mxu0
    %1780 = vmatprep.mubr.bf16.mxu0 0
    %1781 = vmatmul.mubr.bf16.gmra.mxu0 %v898
    %v1782 = vpop.f32.mrf.mxu0
    %v1783 = vadd.f32 0.0, %v1782
    %v1784 = vpop.f32.mrf.mxu0
    %v1785 = vpop.f32.mrf.mxu0
    %v1786 = vadd.f32 0.0, %v1785
    %v1787 = vpop.f32.mrf.mxu0
    %1788 = vmatprep.mubr.bf16.mxu0 0
    %1789 = vmatmul.mubr.bf16.gmra.mxu0 %v899
    %v1790 = vpop.f32.mrf.mxu0
    %v1791 = vadd.f32 0.0, %v1790
    %v1792 = vpop.f32.mrf.mxu0
    %v1793 = vpop.f32.mrf.mxu0
    %v1794 = vadd.f32 0.0, %v1793
    %v1795 = vpop.f32.mrf.mxu0
    %1796 = vmatprep.mubr.bf16.mxu0 0
    %1797 = vmatmul.mubr.bf16.gmra.mxu0 %v900
    %v1798 = vpop.f32.mrf.mxu0
    %v1799 = vadd.f32 0.0, %v1798
    %v1800 = vpop.f32.mrf.mxu0
    %v1801 = vpop.f32.mrf.mxu0
    %v1802 = vadd.f32 0.0, %v1801
    %v1803 = vpop.f32.mrf.mxu0
    %1804 = vmatprep.mubr.bf16.mxu0 0
    %1805 = vmatmul.mubr.bf16.gmra.mxu0 %v901
    %v1806 = vpop.f32.mrf.mxu0
    %v1807 = vadd.f32 0.0, %v1806
    %v1808 = vpop.f32.mrf.mxu0
    %v1809 = vpop.f32.mrf.mxu0
    %v1810 = vadd.f32 0.0, %v1809
    %v1811 = vpop.f32.mrf.mxu0
    %1812 = vmatprep.mubr.bf16.mxu0 0
    %1813 = vmatmul.mubr.bf16.gmra.mxu0 %v902
    %v1814 = vpop.f32.mrf.mxu0
    %v1815 = vadd.f32 0.0, %v1814
    %v1816 = vpop.f32.mrf.mxu0
    %v1817 = vpop.f32.mrf.mxu0
    %v1818 = vadd.f32 0.0, %v1817
    %v1819 = vpop.f32.mrf.mxu0
    %1820 = vmatprep.mubr.bf16.mxu0 0
    %1821 = vmatmul.mubr.bf16.gmra.mxu0 %v903
    %v1822 = vpop.f32.mrf.mxu0
    %v1823 = vadd.f32 0.0, %v1822
    %v1824 = vpop.f32.mrf.mxu0
    %v1825 = vpop.f32.mrf.mxu0
    %v1826 = vadd.f32 0.0, %v1825
    %v1827 = vpop.f32.mrf.mxu0
    %1828 = vmatprep.mubr.bf16.mxu0 0
    %1829 = vmatmul.mubr.bf16.gmra.mxu0 %v904
    %v1830 = vpop.f32.mrf.mxu0
    %v1831 = vadd.f32 0.0, %v1830
    %v1832 = vpop.f32.mrf.mxu0
    %v1833 = vpop.f32.mrf.mxu0
    %v1834 = vadd.f32 0.0, %v1833
    %v1835 = vpop.f32.mrf.mxu0
    %1836 = vmatprep.mubr.bf16.mxu0 0
    %1837 = vmatmul.mubr.bf16.gmra.mxu0 %v905
    %v1838 = vpop.f32.mrf.mxu0
    %v1839 = vadd.f32 0.0, %v1838
    %v1840 = vpop.f32.mrf.mxu0
    %v1841 = vpop.f32.mrf.mxu0
    %v1842 = vadd.f32 0.0, %v1841
    %v1843 = vpop.f32.mrf.mxu0
    %1844 = vmatprep.mubr.bf16.mxu0 0
    %1845 = vmatmul.mubr.bf16.gmra.mxu0 %v906
    %v1846 = vpop.f32.mrf.mxu0
    %v1847 = vadd.f32 0.0, %v1846
    %v1848 = vpop.f32.mrf.mxu0
    %v1849 = vpop.f32.mrf.mxu0
    %v1850 = vadd.f32 0.0, %v1849
    %v1851 = vpop.f32.mrf.mxu0
    %1852 = vmatprep.mubr.bf16.mxu0 0
    %1853 = vmatmul.mubr.bf16.gmra.mxu0 %v907
    %v1854 = vpop.f32.mrf.mxu0
    %v1855 = vadd.f32 0.0, %v1854
    %v1856 = vpop.f32.mrf.mxu0
    %v1857 = vpop.f32.mrf.mxu0
    %v1858 = vadd.f32 0.0, %v1857
    %v1859 = vpop.f32.mrf.mxu0
    %1860 = vmatprep.mubr.bf16.mxu0 0
    %1861 = vmatmul.mubr.bf16.gmra.mxu0 %v908
    %v1862 = vpop.f32.mrf.mxu0
    %v1863 = vadd.f32 0.0, %v1862
    %v1864 = vpop.f32.mrf.mxu0
    %v1865 = vpop.f32.mrf.mxu0
    %v1866 = vadd.f32 0.0, %v1865
    %v1867 = vpop.f32.mrf.mxu0
    %1868 = vmatprep.mubr.bf16.mxu0 0
    %1869 = vmatmul.mubr.bf16.gmra.mxu0 %v909
    %v1870 = vpop.f32.mrf.mxu0
    %v1871 = vadd.f32 0.0, %v1870
    %v1872 = vpop.f32.mrf.mxu0
    %v1873 = vpop.f32.mrf.mxu0
    %v1874 = vadd.f32 0.0, %v1873
    %v1875 = vpop.f32.mrf.mxu0
    %1876 = vmatprep.mubr.bf16.mxu0 0
    %1877 = vmatmul.mubr.bf16.gmra.mxu0 %v910
    %v1878 = vpop.f32.mrf.mxu0
    %v1879 = vadd.f32 0.0, %v1878
    %v1880 = vpop.f32.mrf.mxu0
    %v1881 = vpop.f32.mrf.mxu0
    %v1882 = vadd.f32 0.0, %v1881
    %v1883 = vpop.f32.mrf.mxu0
    %1884 = vmatprep.mubr.bf16.mxu0 0
    %1885 = vmatmul.mubr.bf16.gmra.mxu0 %v911
    %v1886 = vpop.f32.mrf.mxu0
    %v1887 = vadd.f32 0.0, %v1886
    %v1888 = vpop.f32.mrf.mxu0
    %v1889 = vpop.f32.mrf.mxu0
    %v1890 = vadd.f32 0.0, %v1889
    %v1891 = vpop.f32.mrf.mxu0
    %1892 = vmatprep.mubr.bf16.mxu0 0
    %1893 = vmatmul.mubr.bf16.gmra.mxu0 %v912
    %v1894 = vpop.f32.mrf.mxu0
    %v1895 = vadd.f32 0.0, %v1894
    %v1896 = vpop.f32.mrf.mxu0
    %v1897 = vpop.f32.mrf.mxu0
    %v1898 = vadd.f32 0.0, %v1897
    %v1899 = vpop.f32.mrf.mxu0
    %1900 = vmatprep.mubr.bf16.mxu0 0
    %1901 = vmatmul.mubr.bf16.gmra.mxu0 %v913
    %v1902 = vpop.f32.mrf.mxu0
    %v1903 = vadd.f32 0.0, %v1902
    %v1904 = vpop.f32.mrf.mxu0
    %v1905 = vpop.f32.mrf.mxu0
    %v1906 = vadd.f32 0.0, %v1905
    %v1907 = vpop.f32.mrf.mxu0
    %1908 = vmatprep.mubr.bf16.mxu0 0
    %1909 = vmatmul.mubr.bf16.gmra.mxu0 %v914
    %v1910 = vpop.f32.mrf.mxu0
    %v1911 = vadd.f32 0.0, %v1910
    %v1912 = vpop.f32.mrf.mxu0
    %v1913 = vpop.f32.mrf.mxu0
    %v1914 = vadd.f32 0.0, %v1913
    %v1915 = vpop.f32.mrf.mxu0
    %1916 = vmatprep.mubr.bf16.mxu0 0
    %1917 = vmatmul.mubr.bf16.gmra.mxu0 %v915
    %v1918 = vpop.f32.mrf.mxu0
    %v1919 = vadd.f32 0.0, %v1918
    %v1920 = vpop.f32.mrf.mxu0
    %v1921 = vpop.f32.mrf.mxu0
    %v1922 = vadd.f32 0.0, %v1921
    %v1923 = vpop.f32.mrf.mxu0
    %1924 = vmatprep.mubr.bf16.mxu0 0
    %1925 = vmatmul.mubr.bf16.gmra.mxu0 %v916
    %v1926 = vpop.f32.mrf.mxu0
    %v1927 = vadd.f32 0.0, %v1926
    %v1928 = vpop.f32.mrf.mxu0
    %v1929 = vpop.f32.mrf.mxu0
    %v1930 = vadd.f32 0.0, %v1929
    %v1931 = vpop.f32.mrf.mxu0
    %1932 = vmatprep.mubr.bf16.mxu0 0
    %1933 = vmatmul.mubr.bf16.gmra.mxu0 %v917
    %v1934 = vpop.f32.mrf.mxu0
    %v1935 = vadd.f32 0.0, %v1934
    %v1936 = vpop.f32.mrf.mxu0
    %v1937 = vpop.f32.mrf.mxu0
    %v1938 = vadd.f32 0.0, %v1937
    %v1939 = vpop.f32.mrf.mxu0
    %1940 = vmatprep.mubr.bf16.mxu0 0
    %1941 = vmatmul.mubr.bf16.gmra.mxu0 %v918
    %v1942 = vpop.f32.mrf.mxu0
    %v1943 = vadd.f32 0.0, %v1942
    %v1944 = vpop.f32.mrf.mxu0
    %v1945 = vpop.f32.mrf.mxu0
    %v1946 = vadd.f32 0.0, %v1945
    %v1947 = vpop.f32.mrf.mxu0
    %1948 = vmatprep.mubr.bf16.mxu0 0
    %1949 = vmatmul.mubr.bf16.gmra.mxu0 %v919
    %v1950 = vpop.f32.mrf.mxu0
    %v1951 = vadd.f32 0.0, %v1950
    %v1952 = vpop.f32.mrf.mxu0
    %v1953 = vpop.f32.mrf.mxu0
    %v1954 = vadd.f32 0.0, %v1953
    %v1955 = vpop.f32.mrf.mxu0
    %1956 = vmatprep.mubr.bf16.mxu0 0
    %1957 = vmatmul.mubr.bf16.gmra.mxu0 %v920
    %v1958 = vpop.f32.mrf.mxu0
    %v1959 = vadd.f32 0.0, %v1958
    %v1960 = vpop.f32.mrf.mxu0
    %v1961 = vpop.f32.mrf.mxu0
    %v1962 = vadd.f32 0.0, %v1961
    %v1963 = vpop.f32.mrf.mxu0
    %1964 = vmatprep.mubr.bf16.mxu0 0
    %1965 = vmatmul.mubr.bf16.gmra.mxu0 %v921
    %v1966 = vpop.f32.mrf.mxu0
    %v1967 = vadd.f32 0.0, %v1966
    %v1968 = vpop.f32.mrf.mxu0
    %v1969 = vpop.f32.mrf.mxu0
    %v1970 = vadd.f32 0.0, %v1969
    %v1971 = vpop.f32.mrf.mxu0
    %1972 = vmatprep.mubr.bf16.mxu0 0
    %1973 = vmatmul.mubr.bf16.gmra.mxu0 %v922
    %v1974 = vpop.f32.mrf.mxu0
    %v1975 = vadd.f32 0.0, %v1974
    %v1976 = vpop.f32.mrf.mxu0
    %v1977 = vpop.f32.mrf.mxu0
    %v1978 = vadd.f32 0.0, %v1977
    %v1979 = vpop.f32.mrf.mxu0
    %1980 = vmatprep.mubr.bf16.mxu0 0
    %1981 = vmatmul.mubr.bf16.gmra.mxu0 %v923
    %v1982 = vpop.f32.mrf.mxu0
    %v1983 = vadd.f32 0.0, %v1982
    %v1984 = vpop.f32.mrf.mxu0
    %v1985 = vpop.f32.mrf.mxu0
    %v1986 = vadd.f32 0.0, %v1985
    %v1987 = vpop.f32.mrf.mxu0
    %1988 = vmatprep.mubr.bf16.mxu0 0
    %1989 = vmatmul.mubr.bf16.gmra.mxu0 %v924
    %v1990 = vpop.f32.mrf.mxu0
    %v1991 = vadd.f32 0.0, %v1990
    %v1992 = vpop.f32.mrf.mxu0
    %v1993 = vpop.f32.mrf.mxu0
    %v1994 = vadd.f32 0.0, %v1993
    %v1995 = vpop.f32.mrf.mxu0
    %1996 = vmatprep.mubr.bf16.mxu0 0
    %1997 = vmatmul.mubr.bf16.gmra.mxu0 %v925
    %v1998 = vpop.f32.mrf.mxu0
    %v1999 = vadd.f32 0.0, %v1998
    %v2000 = vpop.f32.mrf.mxu0
    %v2001 = vpop.f32.mrf.mxu0
    %v2002 = vadd.f32 0.0, %v2001
    %v2003 = vpop.f32.mrf.mxu0
    %2004 = vmatprep.mubr.bf16.mxu0 0
    %2005 = vmatmul.mubr.bf16.gmra.mxu0 %v926
    %v2006 = vpop.f32.mrf.mxu0
    %v2007 = vadd.f32 0.0, %v2006
    %v2008 = vpop.f32.mrf.mxu0
    %v2009 = vpop.f32.mrf.mxu0
    %v2010 = vadd.f32 0.0, %v2009
    %v2011 = vpop.f32.mrf.mxu0
    %2012 = vmatprep.mubr.bf16.mxu0 0
    %2013 = vmatmul.mubr.bf16.gmra.mxu0 %v927
    %v2014 = vpop.f32.mrf.mxu0
    %v2015 = vadd.f32 0.0, %v2014
    %v2016 = vpop.f32.mrf.mxu0
    %v2017 = vpop.f32.mrf.mxu0
    %v2018 = vadd.f32 0.0, %v2017
    %v2019 = vpop.f32.mrf.mxu0
    %2020 = vmatprep.mubr.bf16.mxu0 0
    %2021 = vmatmul.mubr.bf16.gmra.mxu0 %v928
    %v2022 = vpop.f32.mrf.mxu0
    %v2023 = vadd.f32 0.0, %v2022
    %v2024 = vpop.f32.mrf.mxu0
    %v2025 = vpop.f32.mrf.mxu0
    %v2026 = vadd.f32 0.0, %v2025
    %v2027 = vpop.f32.mrf.mxu0
    %2028 = vmatprep.mubr.bf16.mxu0 0
    %2029 = vmatmul.mubr.bf16.gmra.mxu0 %v929
    %v2030 = vpop.f32.mrf.mxu0
    %v2031 = vadd.f32 0.0, %v2030
    %v2032 = vpop.f32.mrf.mxu0
    %v2033 = vpop.f32.mrf.mxu0
    %v2034 = vadd.f32 0.0, %v2033
    %v2035 = vpop.f32.mrf.mxu0
    %2036 = vmatprep.mubr.bf16.mxu0 0
    %2037 = vmatmul.mubr.bf16.gmra.mxu0 %v930
    %v2038 = vpop.f32.mrf.mxu0
    %v2039 = vadd.f32 0.0, %v2038
    %v2040 = vpop.f32.mrf.mxu0
    %v2041 = vpop.f32.mrf.mxu0
    %v2042 = vadd.f32 0.0, %v2041
    %v2043 = vpop.f32.mrf.mxu0
    %2044 = vmatprep.mubr.bf16.mxu0 0
    %2045 = vmatmul.mubr.bf16.gmra.mxu0 %v931
    %v2046 = vpop.f32.mrf.mxu0
    %v2047 = vadd.f32 0.0, %v2046
    %v2048 = vpop.f32.mrf.mxu0
    %v2049 = vpop.f32.mrf.mxu0
    %v2050 = vadd.f32 0.0, %v2049
    %v2051 = vpop.f32.mrf.mxu0
    %2052 = vmatprep.mubr.bf16.mxu0 0
    %2053 = vmatmul.mubr.bf16.gmra.mxu0 %v932
    %v2054 = vpop.f32.mrf.mxu0
    %v2055 = vadd.f32 0.0, %v2054
    %v2056 = vpop.f32.mrf.mxu0
    %v2057 = vpop.f32.mrf.mxu0
    %v2058 = vadd.f32 0.0, %v2057
    %v2059 = vpop.f32.mrf.mxu0
    %2060 = vmatprep.mubr.bf16.mxu0 0
    %2061 = vmatmul.mubr.bf16.gmra.mxu0 %v933
    %v2062 = vpop.f32.mrf.mxu0
    %v2063 = vadd.f32 0.0, %v2062
    %v2064 = vpop.f32.mrf.mxu0
    %v2065 = vpop.f32.mrf.mxu0
    %v2066 = vadd.f32 0.0, %v2065
    %v2067 = vpop.f32.mrf.mxu0
    %2068 = vmatprep.mubr.bf16.mxu0 0
    %2069 = vmatmul.mubr.bf16.gmra.mxu0 %v934
    %v2070 = vpop.f32.mrf.mxu0
    %v2071 = vadd.f32 0.0, %v2070
    %v2072 = vpop.f32.mrf.mxu0
    %v2073 = vpop.f32.mrf.mxu0
    %v2074 = vadd.f32 0.0, %v2073
    %v2075 = vpop.f32.mrf.mxu0
    %2076 = vmatprep.mubr.bf16.mxu0 0
    %2077 = vmatmul.mubr.bf16.gmra.mxu0 %v935
    %v2078 = vpop.f32.mrf.mxu0
    %v2079 = vadd.f32 0.0, %v2078
    %v2080 = vpop.f32.mrf.mxu0
    %v2081 = vpop.f32.mrf.mxu0
    %v2082 = vadd.f32 0.0, %v2081
    %v2083 = vpop.f32.mrf.mxu0
    %2084 = vmatprep.mubr.bf16.mxu0 0
    %2085 = vmatmul.mubr.bf16.gmra.mxu0 %v936
    %v2086 = vpop.f32.mrf.mxu0
    %v2087 = vadd.f32 0.0, %v2086
    %v2088 = vpop.f32.mrf.mxu0
    %v2089 = vpop.f32.mrf.mxu0
    %v2090 = vadd.f32 0.0, %v2089
    %v2091 = vpop.f32.mrf.mxu0
    %2092 = vmatprep.mubr.bf16.mxu0 0
    %2093 = vmatmul.mubr.bf16.gmra.mxu0 %v937
    %v2094 = vpop.f32.mrf.mxu0
    %v2095 = vadd.f32 0.0, %v2094
    %v2096 = vpop.f32.mrf.mxu0
    %v2097 = vpop.f32.mrf.mxu0
    %v2098 = vadd.f32 0.0, %v2097
    %v2099 = vpop.f32.mrf.mxu0
    %2100 = vmatprep.mubr.bf16.mxu0 0
    %2101 = vmatmul.mubr.bf16.gmra.mxu0 %v938
    %v2102 = vpop.f32.mrf.mxu0
    %v2103 = vadd.f32 0.0, %v2102
    %v2104 = vpop.f32.mrf.mxu0
    %v2105 = vpop.f32.mrf.mxu0
    %v2106 = vadd.f32 0.0, %v2105
    %v2107 = vpop.f32.mrf.mxu0
    %2108 = vmatprep.mubr.bf16.mxu0 0
    %2109 = vmatmul.mubr.bf16.gmra.mxu0 %v939
    %v2110 = vpop.f32.mrf.mxu0
    %v2111 = vadd.f32 0.0, %v2110
    %v2112 = vpop.f32.mrf.mxu0
    %v2113 = vpop.f32.mrf.mxu0
    %v2114 = vadd.f32 0.0, %v2113
    %v2115 = vpop.f32.mrf.mxu0
    %2116 = vmatprep.mubr.bf16.mxu0 0
    %2117 = vmatmul.mubr.bf16.gmra.mxu0 %v940
    %v2118 = vpop.f32.mrf.mxu0
    %v2119 = vadd.f32 0.0, %v2118
    %v2120 = vpop.f32.mrf.mxu0
    %v2121 = vpop.f32.mrf.mxu0
    %v2122 = vadd.f32 0.0, %v2121
    %v2123 = vpop.f32.mrf.mxu0
    %2124 = vmatprep.mubr.bf16.mxu0 0
    %2125 = vmatmul.mubr.bf16.gmra.mxu0 %v941
    %v2126 = vpop.f32.mrf.mxu0
    %v2127 = vadd.f32 0.0, %v2126
    %v2128 = vpop.f32.mrf.mxu0
    %v2129 = vpop.f32.mrf.mxu0
    %v2130 = vadd.f32 0.0, %v2129
    %v2131 = vpop.f32.mrf.mxu0
    %2132 = vmatprep.mubr.bf16.mxu0 0
    %2133 = vmatmul.mubr.bf16.gmra.mxu0 %v942
    %v2134 = vpop.f32.mrf.mxu0
    %v2135 = vadd.f32 0.0, %v2134
    %v2136 = vpop.f32.mrf.mxu0
    %v2137 = vpop.f32.mrf.mxu0
    %v2138 = vadd.f32 0.0, %v2137
    %v2139 = vpop.f32.mrf.mxu0
    %2140 = vmatprep.mubr.bf16.mxu0 0
    %2141 = vmatmul.mubr.bf16.gmra.mxu0 %v943
    %v2142 = vpop.f32.mrf.mxu0
    %v2143 = vadd.f32 0.0, %v2142
    %v2144 = vpop.f32.mrf.mxu0
    %v2145 = vpop.f32.mrf.mxu0
    %v2146 = vadd.f32 0.0, %v2145
    %v2147 = vpop.f32.mrf.mxu0
    %2148 = vmatprep.mubr.bf16.mxu0 0
    %2149 = vmatmul.mubr.bf16.gmra.mxu0 %v944
    %v2150 = vpop.f32.mrf.mxu0
    %v2151 = vadd.f32 0.0, %v2150
    %v2152 = vpop.f32.mrf.mxu0
    %v2153 = vpop.f32.mrf.mxu0
    %v2154 = vadd.f32 0.0, %v2153
    %v2155 = vpop.f32.mrf.mxu0
    %2156 = vmatprep.mubr.bf16.mxu0 0
    %2157 = vmatmul.mubr.bf16.gmra.mxu0 %v945
    %v2158 = vpop.f32.mrf.mxu0
    %v2159 = vadd.f32 0.0, %v2158
    %v2160 = vpop.f32.mrf.mxu0
    %v2161 = vpop.f32.mrf.mxu0
    %v2162 = vadd.f32 0.0, %v2161
    %v2163 = vpop.f32.mrf.mxu0
    %2164 = vmatprep.mubr.bf16.mxu0 0
    %2165 = vmatmul.mubr.bf16.gmra.mxu0 %v946
    %v2166 = vpop.f32.mrf.mxu0
    %v2167 = vadd.f32 0.0, %v2166
    %v2168 = vpop.f32.mrf.mxu0
    %v2169 = vpop.f32.mrf.mxu0
    %v2170 = vadd.f32 0.0, %v2169
    %v2171 = vpop.f32.mrf.mxu0
    %2172 = vmatprep.mubr.bf16.mxu0 0
    %2173 = vmatmul.mubr.bf16.gmra.mxu0 %v947
    %v2174 = vpop.f32.mrf.mxu0
    %v2175 = vadd.f32 0.0, %v2174
    %v2176 = vpop.f32.mrf.mxu0
    %v2177 = vpop.f32.mrf.mxu0
    %v2178 = vadd.f32 0.0, %v2177
    %v2179 = vpop.f32.mrf.mxu0
    %2180 = vdwg.mxu0
    %v2181 = vmax.f32 %v1159, 0.0
    %v2182 = vmax.f32 %v1162, 0.0
    %v2183 = vmax.f32 %v1167, 0.0
    %v2184 = vmax.f32 %v1170, 0.0
    %v2185 = vmax.f32 %v1175, 0.0
    %v2186 = vmax.f32 %v1178, 0.0
    %v2187 = vmax.f32 %v1183, 0.0
    %v2188 = vmax.f32 %v1186, 0.0
    %v2189 = vmax.f32 %v1191, 0.0
    %v2190 = vmax.f32 %v1194, 0.0
    %v2191 = vmax.f32 %v1199, 0.0
    %v2192 = vmax.f32 %v1202, 0.0
    %v2193 = vmax.f32 %v1207, 0.0
    %v2194 = vmax.f32 %v1210, 0.0
    %v2195 = vmax.f32 %v1215, 0.0
    %v2196 = vmax.f32 %v1218, 0.0
    %v2197 = vmax.f32 %v1223, 0.0
    %v2198 = vmax.f32 %v1226, 0.0
    %v2199 = vmax.f32 %v1231, 0.0
    %v2200 = vmax.f32 %v1234, 0.0
    %v2201 = vmax.f32 %v1239, 0.0
    %v2202 = vmax.f32 %v1242, 0.0
    %v2203 = vmax.f32 %v1247, 0.0
    %v2204 = vmax.f32 %v1250, 0.0
    %v2205 = vmax.f32 %v1255, 0.0
    %v2206 = vmax.f32 %v1258, 0.0
    %v2207 = vmax.f32 %v1263, 0.0
    %v2208 = vmax.f32 %v1266, 0.0
    %v2209 = vmax.f32 %v1271, 0.0
    %v2210 = vmax.f32 %v1274, 0.0
    %v2211 = vmax.f32 %v1279, 0.0
    %v2212 = vmax.f32 %v1282, 0.0
    %v2213 = vmax.f32 %v1287, 0.0
    %v2214 = vmax.f32 %v1290, 0.0
    %v2215 = vmax.f32 %v1295, 0.0
    %v2216 = vmax.f32 %v1298, 0.0
    %v2217 = vmax.f32 %v1303, 0.0
    %v2218 = vmax.f32 %v1306, 0.0
    %v2219 = vmax.f32 %v1311, 0.0
    %v2220 = vmax.f32 %v1314, 0.0
    %v2221 = vmax.f32 %v1319, 0.0
    %v2222 = vmax.f32 %v1322, 0.0
    %v2223 = vmax.f32 %v1327, 0.0
    %v2224 = vmax.f32 %v1330, 0.0
    %v2225 = vmax.f32 %v1335, 0.0
    %v2226 = vmax.f32 %v1338, 0.0
    %v2227 = vmax.f32 %v1343, 0.0
    %v2228 = vmax.f32 %v1346, 0.0
    %v2229 = vmax.f32 %v1351, 0.0
    %v2230 = vmax.f32 %v1354, 0.0
    %v2231 = vmax.f32 %v1359, 0.0
    %v2232 = vmax.f32 %v1362, 0.0
    %v2233 = vmax.f32 %v1367, 0.0
    %v2234 = vmax.f32 %v1370, 0.0
    %v2235 = vmax.f32 %v1375, 0.0
    %v2236 = vmax.f32 %v1378, 0.0
    %v2237 = vmax.f32 %v1383, 0.0
    %v2238 = vmax.f32 %v1386, 0.0
    %v2239 = vmax.f32 %v1391, 0.0
    %v2240 = vmax.f32 %v1394, 0.0
    %v2241 = vmax.f32 %v1399, 0.0
    %v2242 = vmax.f32 %v1402, 0.0
    %v2243 = vmax.f32 %v1407, 0.0
    %v2244 = vmax.f32 %v1410, 0.0
    %v2245 = vmax.f32 %v1415, 0.0
    %v2246 = vmax.f32 %v1418, 0.0
    %v2247 = vmax.f32 %v1423, 0.0
    %v2248 = vmax.f32 %v1426, 0.0
    %v2249 = vmax.f32 %v1431, 0.0
    %v2250 = vmax.f32 %v1434, 0.0
    %v2251 = vmax.f32 %v1439, 0.0
    %v2252 = vmax.f32 %v1442, 0.0
    %v2253 = vmax.f32 %v1447, 0.0
    %v2254 = vmax.f32 %v1450, 0.0
    %v2255 = vmax.f32 %v1455, 0.0
    %v2256 = vmax.f32 %v1458, 0.0
    %v2257 = vmax.f32 %v1463, 0.0
    %v2258 = vmax.f32 %v1466, 0.0
    %v2259 = vmax.f32 %v1471, 0.0
    %v2260 = vmax.f32 %v1474, 0.0
    %v2261 = vmax.f32 %v1479, 0.0
    %v2262 = vmax.f32 %v1482, 0.0
    %v2263 = vmax.f32 %v1487, 0.0
    %v2264 = vmax.f32 %v1490, 0.0
    %v2265 = vmax.f32 %v1495, 0.0
    %v2266 = vmax.f32 %v1498, 0.0
    %v2267 = vmax.f32 %v1503, 0.0
    %v2268 = vmax.f32 %v1506, 0.0
    %v2269 = vmax.f32 %v1511, 0.0
    %v2270 = vmax.f32 %v1514, 0.0
    %v2271 = vmax.f32 %v1519, 0.0
    %v2272 = vmax.f32 %v1522, 0.0
    %v2273 = vmax.f32 %v1527, 0.0
    %v2274 = vmax.f32 %v1530, 0.0
    %v2275 = vmax.f32 %v1535, 0.0
    %v2276 = vmax.f32 %v1538, 0.0
    %v2277 = vmax.f32 %v1543, 0.0
    %v2278 = vmax.f32 %v1546, 0.0
    %v2279 = vmax.f32 %v1551, 0.0
    %v2280 = vmax.f32 %v1554, 0.0
    %v2281 = vmax.f32 %v1559, 0.0
    %v2282 = vmax.f32 %v1562, 0.0
    %v2283 = vmax.f32 %v1567, 0.0
    %v2284 = vmax.f32 %v1570, 0.0
    %v2285 = vmax.f32 %v1575, 0.0
    %v2286 = vmax.f32 %v1578, 0.0
    %v2287 = vmax.f32 %v1583, 0.0
    %v2288 = vmax.f32 %v1586, 0.0
    %v2289 = vmax.f32 %v1591, 0.0
    %v2290 = vmax.f32 %v1594, 0.0
    %v2291 = vmax.f32 %v1599, 0.0
    %v2292 = vmax.f32 %v1602, 0.0
    %v2293 = vmax.f32 %v1607, 0.0
    %v2294 = vmax.f32 %v1610, 0.0
    %v2295 = vmax.f32 %v1615, 0.0
    %v2296 = vmax.f32 %v1618, 0.0
    %v2297 = vmax.f32 %v1623, 0.0
    %v2298 = vmax.f32 %v1626, 0.0
    %v2299 = vmax.f32 %v1631, 0.0
    %v2300 = vmax.f32 %v1634, 0.0
    %v2301 = vmax.f32 %v1639, 0.0
    %v2302 = vmax.f32 %v1642, 0.0
    %v2303 = vmax.f32 %v1647, 0.0
    %v2304 = vmax.f32 %v1650, 0.0
    %v2305 = vmax.f32 %v1655, 0.0
    %v2306 = vmax.f32 %v1658, 0.0
    %v2307 = vmax.f32 %v1663, 0.0
    %v2308 = vmax.f32 %v1666, 0.0
    %v2309 = vmax.f32 %v1671, 0.0
    %v2310 = vmax.f32 %v1674, 0.0
    %v2311 = vmax.f32 %v1679, 0.0
    %v2312 = vmax.f32 %v1682, 0.0
    %v2313 = vmax.f32 %v1687, 0.0
    %v2314 = vmax.f32 %v1690, 0.0
    %v2315 = vmax.f32 %v1695, 0.0
    %v2316 = vmax.f32 %v1698, 0.0
    %v2317 = vmax.f32 %v1703, 0.0
    %v2318 = vmax.f32 %v1706, 0.0
    %v2319 = vmax.f32 %v1711, 0.0
    %v2320 = vmax.f32 %v1714, 0.0
    %v2321 = vmax.f32 %v1719, 0.0
    %v2322 = vmax.f32 %v1722, 0.0
    %v2323 = vmax.f32 %v1727, 0.0
    %v2324 = vmax.f32 %v1730, 0.0
    %v2325 = vmax.f32 %v1735, 0.0
    %v2326 = vmax.f32 %v1738, 0.0
    %v2327 = vmax.f32 %v1743, 0.0
    %v2328 = vmax.f32 %v1746, 0.0
    %v2329 = vmax.f32 %v1751, 0.0
    %v2330 = vmax.f32 %v1754, 0.0
    %v2331 = vmax.f32 %v1759, 0.0
    %v2332 = vmax.f32 %v1762, 0.0
    %v2333 = vmax.f32 %v1767, 0.0
    %v2334 = vmax.f32 %v1770, 0.0
    %v2335 = vmax.f32 %v1775, 0.0
    %v2336 = vmax.f32 %v1778, 0.0
    %v2337 = vmax.f32 %v1783, 0.0
    %v2338 = vmax.f32 %v1786, 0.0
    %v2339 = vmax.f32 %v1791, 0.0
    %v2340 = vmax.f32 %v1794, 0.0
    %v2341 = vmax.f32 %v1799, 0.0
    %v2342 = vmax.f32 %v1802, 0.0
    %v2343 = vmax.f32 %v1807, 0.0
    %v2344 = vmax.f32 %v1810, 0.0
    %v2345 = vmax.f32 %v1815, 0.0
    %v2346 = vmax.f32 %v1818, 0.0
    %v2347 = vmax.f32 %v1823, 0.0
    %v2348 = vmax.f32 %v1826, 0.0
    %v2349 = vmax.f32 %v1831, 0.0
    %v2350 = vmax.f32 %v1834, 0.0
    %v2351 = vmax.f32 %v1839, 0.0
    %v2352 = vmax.f32 %v1842, 0.0
    %v2353 = vmax.f32 %v1847, 0.0
    %v2354 = vmax.f32 %v1850, 0.0
    %v2355 = vmax.f32 %v1855, 0.0
    %v2356 = vmax.f32 %v1858, 0.0
    %v2357 = vmax.f32 %v1863, 0.0
    %v2358 = vmax.f32 %v1866, 0.0
    %v2359 = vmax.f32 %v1871, 0.0
    %v2360 = vmax.f32 %v1874, 0.0
    %v2361 = vmax.f32 %v1879, 0.0
    %v2362 = vmax.f32 %v1882, 0.0
    %v2363 = vmax.f32 %v1887, 0.0
    %v2364 = vmax.f32 %v1890, 0.0
    %v2365 = vmax.f32 %v1895, 0.0
    %v2366 = vmax.f32 %v1898, 0.0
    %v2367 = vmax.f32 %v1903, 0.0
    %v2368 = vmax.f32 %v1906, 0.0
    %v2369 = vmax.f32 %v1911, 0.0
    %v2370 = vmax.f32 %v1914, 0.0
    %v2371 = vmax.f32 %v1919, 0.0
    %v2372 = vmax.f32 %v1922, 0.0
    %v2373 = vmax.f32 %v1927, 0.0
    %v2374 = vmax.f32 %v1930, 0.0
    %v2375 = vmax.f32 %v1935, 0.0
    %v2376 = vmax.f32 %v1938, 0.0
    %v2377 = vmax.f32 %v1943, 0.0
    %v2378 = vmax.f32 %v1946, 0.0
    %v2379 = vmax.f32 %v1951, 0.0
    %v2380 = vmax.f32 %v1954, 0.0
    %v2381 = vmax.f32 %v1959, 0.0
    %v2382 = vmax.f32 %v1962, 0.0
    %v2383 = vmax.f32 %v1967, 0.0
    %v2384 = vmax.f32 %v1970, 0.0
    %v2385 = vmax.f32 %v1975, 0.0
    %v2386 = vmax.f32 %v1978, 0.0
    %v2387 = vmax.f32 %v1983, 0.0
    %v2388 = vmax.f32 %v1986, 0.0
    %v2389 = vmax.f32 %v1991, 0.0
    %v2390 = vmax.f32 %v1994, 0.0
    %v2391 = vmax.f32 %v1999, 0.0
    %v2392 = vmax.f32 %v2002, 0.0
    %v2393 = vmax.f32 %v2007, 0.0
    %v2394 = vmax.f32 %v2010, 0.0
    %v2395 = vmax.f32 %v2015, 0.0
    %v2396 = vmax.f32 %v2018, 0.0
    %v2397 = vmax.f32 %v2023, 0.0
    %v2398 = vmax.f32 %v2026, 0.0
    %v2399 = vmax.f32 %v2031, 0.0
    %v2400 = vmax.f32 %v2034, 0.0
    %v2401 = vmax.f32 %v2039, 0.0
    %v2402 = vmax.f32 %v2042, 0.0
    %v2403 = vmax.f32 %v2047, 0.0
    %v2404 = vmax.f32 %v2050, 0.0
    %v2405 = vmax.f32 %v2055, 0.0
    %v2406 = vmax.f32 %v2058, 0.0
    %v2407 = vmax.f32 %v2063, 0.0
    %v2408 = vmax.f32 %v2066, 0.0
    %v2409 = vmax.f32 %v2071, 0.0
    %v2410 = vmax.f32 %v2074, 0.0
    %v2411 = vmax.f32 %v2079, 0.0
    %v2412 = vmax.f32 %v2082, 0.0
    %v2413 = vmax.f32 %v2087, 0.0
    %v2414 = vmax.f32 %v2090, 0.0
    %v2415 = vmax.f32 %v2095, 0.0
    %v2416 = vmax.f32 %v2098, 0.0
    %v2417 = vmax.f32 %v2103, 0.0
    %v2418 = vmax.f32 %v2106, 0.0
    %v2419 = vmax.f32 %v2111, 0.0
    %v2420 = vmax.f32 %v2114, 0.0
    %v2421 = vmax.f32 %v2119, 0.0
    %v2422 = vmax.f32 %v2122, 0.0
    %v2423 = vmax.f32 %v2127, 0.0
    %v2424 = vmax.f32 %v2130, 0.0
    %v2425 = vmax.f32 %v2135, 0.0
    %v2426 = vmax.f32 %v2138, 0.0
    %v2427 = vmax.f32 %v2143, 0.0
    %v2428 = vmax.f32 %v2146, 0.0
    %v2429 = vmax.f32 %v2151, 0.0
    %v2430 = vmax.f32 %v2154, 0.0
    %v2431 = vmax.f32 %v2159, 0.0
    %v2432 = vmax.f32 %v2162, 0.0
    %v2433 = vmax.f32 %v2167, 0.0
    %v2434 = vmax.f32 %v2170, 0.0
    %v2435 = vmax.f32 %v2175, 0.0
    %v2436 = vmax.f32 %v2178, 0.0
    %v2437 = vadd.f32 %v2181, %v2182
    %v2438 = vadd.f32 %v2437, %v2183
    %v2439 = vadd.f32 %v2438, %v2184
    %v2440 = vadd.f32 %v2439, %v2185
    %v2441 = vadd.f32 %v2440, %v2186
    %v2442 = vadd.f32 %v2441, %v2187
    %v2443 = vadd.f32 %v2442, %v2188
    %v2444 = vadd.f32 %v2443, %v2189
    %v2445 = vadd.f32 %v2444, %v2190
    %v2446 = vadd.f32 %v2445, %v2191
    %v2447 = vadd.f32 %v2446, %v2192
    %v2448 = vadd.f32 %v2447, %v2193
    %v2449 = vadd.f32 %v2448, %v2194
    %v2450 = vadd.f32 %v2449, %v2195
    %v2451 = vadd.f32 %v2450, %v2196
    %v2452 = vadd.f32 %v2451, %v2197
    %v2453 = vadd.f32 %v2452, %v2198
    %v2454 = vadd.f32 %v2453, %v2199
    %v2455 = vadd.f32 %v2454, %v2200
    %v2456 = vadd.f32 %v2455, %v2201
    %v2457 = vadd.f32 %v2456, %v2202
    %v2458 = vadd.f32 %v2457, %v2203
    %v2459 = vadd.f32 %v2458, %v2204
    %v2460 = vadd.f32 %v2459, %v2205
    %v2461 = vadd.f32 %v2460, %v2206
    %v2462 = vadd.f32 %v2461, %v2207
    %v2463 = vadd.f32 %v2462, %v2208
    %v2464 = vadd.f32 %v2463, %v2209
    %v2465 = vadd.f32 %v2464, %v2210
    %v2466 = vadd.f32 %v2465, %v2211
    %v2467 = vadd.f32 %v2466, %v2212
    %v2468 = vrot.slane %v2467, 4
    %v2469 = vadd.f32 %v2467, %v2468
    %v2470 = vrot.slane %v2469, 2
    %v2471 = vadd.f32 %v2469, %v2470
    %v2472 = vrot.slane %v2471, 1
    %v2473 = vadd.f32 %v2471, %v2472
    %v2474 = vadd.f32 %v2213, %v2214
    %v2475 = vadd.f32 %v2474, %v2215
    %v2476 = vadd.f32 %v2475, %v2216
    %v2477 = vadd.f32 %v2476, %v2217
    %v2478 = vadd.f32 %v2477, %v2218
    %v2479 = vadd.f32 %v2478, %v2219
    %v2480 = vadd.f32 %v2479, %v2220
    %v2481 = vadd.f32 %v2480, %v2221
    %v2482 = vadd.f32 %v2481, %v2222
    %v2483 = vadd.f32 %v2482, %v2223
    %v2484 = vadd.f32 %v2483, %v2224
    %v2485 = vadd.f32 %v2484, %v2225
    %v2486 = vadd.f32 %v2485, %v2226
    %v2487 = vadd.f32 %v2486, %v2227
    %v2488 = vadd.f32 %v2487, %v2228
    %v2489 = vadd.f32 %v2488, %v2229
    %v2490 = vadd.f32 %v2489, %v2230
    %v2491 = vadd.f32 %v2490, %v2231
    %v2492 = vadd.f32 %v2491, %v2232
    %v2493 = vadd.f32 %v2492, %v2233
    %v2494 = vadd.f32 %v2493, %v2234
    %v2495 = vadd.f32 %v2494, %v2235
    %v2496 = vadd.f32 %v2495, %v2236
    %v2497 = vadd.f32 %v2496, %v2237
    %v2498 = vadd.f32 %v2497, %v2238
    %v2499 = vadd.f32 %v2498, %v2239
    %v2500 = vadd.f32 %v2499, %v2240
    %v2501 = vadd.f32 %v2500, %v2241
    %v2502 = vadd.f32 %v2501, %v2242
    %v2503 = vadd.f32 %v2502, %v2243
    %v2504 = vadd.f32 %v2503, %v2244
    %v2505 = vrot.slane %v2504, 4
    %v2506 = vadd.f32 %v2504, %v2505
    %v2507 = vrot.slane %v2506, 2
    %v2508 = vadd.f32 %v2506, %v2507
    %v2509 = vrot.slane %v2508, 1
    %v2510 = vadd.f32 %v2508, %v2509
    %v2511 = vadd.f32 %v2245, %v2246
    %v2512 = vadd.f32 %v2511, %v2247
    %v2513 = vadd.f32 %v2512, %v2248
    %v2514 = vadd.f32 %v2513, %v2249
    %v2515 = vadd.f32 %v2514, %v2250
    %v2516 = vadd.f32 %v2515, %v2251
    %v2517 = vadd.f32 %v2516, %v2252
    %v2518 = vadd.f32 %v2517, %v2253
    %v2519 = vadd.f32 %v2518, %v2254
    %v2520 = vadd.f32 %v2519, %v2255
    %v2521 = vadd.f32 %v2520, %v2256
    %v2522 = vadd.f32 %v2521, %v2257
    %v2523 = vadd.f32 %v2522, %v2258
    %v2524 = vadd.f32 %v2523, %v2259
    %v2525 = vadd.f32 %v2524, %v2260
    %v2526 = vadd.f32 %v2525, %v2261
    %v2527 = vadd.f32 %v2526, %v2262
    %v2528 = vadd.f32 %v2527, %v2263
    %v2529 = vadd.f32 %v2528, %v2264
    %v2530 = vadd.f32 %v2529, %v2265
    %v2531 = vadd.f32 %v2530, %v2266
    %v2532 = vadd.f32 %v2531, %v2267
    %v2533 = vadd.f32 %v2532, %v2268
    %v2534 = vadd.f32 %v2533, %v2269
    %v2535 = vadd.f32 %v2534, %v2270
    %v2536 = vadd.f32 %v2535, %v2271
    %v2537 = vadd.f32 %v2536, %v2272
    %v2538 = vadd.f32 %v2537, %v2273
    %v2539 = vadd.f32 %v2538, %v2274
    %v2540 = vadd.f32 %v2539, %v2275
    %v2541 = vadd.f32 %v2540, %v2276
    %v2542 = vrot.slane %v2541, 4
    %v2543 = vadd.f32 %v2541, %v2542
    %v2544 = vrot.slane %v2543, 2
    %v2545 = vadd.f32 %v2543, %v2544
    %v2546 = vrot.slane %v2545, 1
    %v2547 = vadd.f32 %v2545, %v2546
    %v2548 = vadd.f32 %v2277, %v2278
    %v2549 = vadd.f32 %v2548, %v2279
    %v2550 = vadd.f32 %v2549, %v2280
    %v2551 = vadd.f32 %v2550, %v2281
    %v2552 = vadd.f32 %v2551, %v2282
    %v2553 = vadd.f32 %v2552, %v2283
    %v2554 = vadd.f32 %v2553, %v2284
    %v2555 = vadd.f32 %v2554, %v2285
    %v2556 = vadd.f32 %v2555, %v2286
    %v2557 = vadd.f32 %v2556, %v2287
    %v2558 = vadd.f32 %v2557, %v2288
    %v2559 = vadd.f32 %v2558, %v2289
    %v2560 = vadd.f32 %v2559, %v2290
    %v2561 = vadd.f32 %v2560, %v2291
    %v2562 = vadd.f32 %v2561, %v2292
    %v2563 = vadd.f32 %v2562, %v2293
    %v2564 = vadd.f32 %v2563, %v2294
    %v2565 = vadd.f32 %v2564, %v2295
    %v2566 = vadd.f32 %v2565, %v2296
    %v2567 = vadd.f32 %v2566, %v2297
    %v2568 = vadd.f32 %v2567, %v2298
    %v2569 = vadd.f32 %v2568, %v2299
    %v2570 = vadd.f32 %v2569, %v2300
    %v2571 = vadd.f32 %v2570, %v2301
    %v2572 = vadd.f32 %v2571, %v2302
    %v2573 = vadd.f32 %v2572, %v2303
    %v2574 = vadd.f32 %v2573, %v2304
    %v2575 = vadd.f32 %v2574, %v2305
    %v2576 = vadd.f32 %v2575, %v2306
    %v2577 = vadd.f32 %v2576, %v2307
    %v2578 = vadd.f32 %v2577, %v2308
    %v2579 = vrot.slane %v2578, 4
    %v2580 = vadd.f32 %v2578, %v2579
    %v2581 = vrot.slane %v2580, 2
    %v2582 = vadd.f32 %v2580, %v2581
    %v2583 = vrot.slane %v2582, 1
    %v2584 = vadd.f32 %v2582, %v2583
    %v2585 = vadd.f32 %v2309, %v2310
    %v2586 = vadd.f32 %v2585, %v2311
    %v2587 = vadd.f32 %v2586, %v2312
    %v2588 = vadd.f32 %v2587, %v2313
    %v2589 = vadd.f32 %v2588, %v2314
    %v2590 = vadd.f32 %v2589, %v2315
    %v2591 = vadd.f32 %v2590, %v2316
    %v2592 = vadd.f32 %v2591, %v2317
    %v2593 = vadd.f32 %v2592, %v2318
    %v2594 = vadd.f32 %v2593, %v2319
    %v2595 = vadd.f32 %v2594, %v2320
    %v2596 = vadd.f32 %v2595, %v2321
    %v2597 = vadd.f32 %v2596, %v2322
    %v2598 = vadd.f32 %v2597, %v2323
    %v2599 = vadd.f32 %v2598, %v2324
    %v2600 = vadd.f32 %v2599, %v2325
    %v2601 = vadd.f32 %v2600, %v2326
    %v2602 = vadd.f32 %v2601, %v2327
    %v2603 = vadd.f32 %v2602, %v2328
    %v2604 = vadd.f32 %v2603, %v2329
    %v2605 = vadd.f32 %v2604, %v2330
    %v2606 = vadd.f32 %v2605, %v2331
    %v2607 = vadd.f32 %v2606, %v2332
    %v2608 = vadd.f32 %v2607, %v2333
    %v2609 = vadd.f32 %v2608, %v2334
    %v2610 = vadd.f32 %v2609, %v2335
    %v2611 = vadd.f32 %v2610, %v2336
    %v2612 = vadd.f32 %v2611, %v2337
    %v2613 = vadd.f32 %v2612, %v2338
    %v2614 = vadd.f32 %v2613, %v2339
    %v2615 = vadd.f32 %v2614, %v2340
    %v2616 = vrot.slane %v2615, 4
    %v2617 = vadd.f32 %v2615, %v2616
    %v2618 = vrot.slane %v2617, 2
    %v2619 = vadd.f32 %v2617, %v2618
    %v2620 = vrot.slane %v2619, 1
    %v2621 = vadd.f32 %v2619, %v2620
    %v2622 = vadd.f32 %v2341, %v2342
    %v2623 = vadd.f32 %v2622, %v2343
    %v2624 = vadd.f32 %v2623, %v2344
    %v2625 = vadd.f32 %v2624, %v2345
    %v2626 = vadd.f32 %v2625, %v2346
    %v2627 = vadd.f32 %v2626, %v2347
    %v2628 = vadd.f32 %v2627, %v2348
    %v2629 = vadd.f32 %v2628, %v2349
    %v2630 = vadd.f32 %v2629, %v2350
    %v2631 = vadd.f32 %v2630, %v2351
    %v2632 = vadd.f32 %v2631, %v2352
    %v2633 = vadd.f32 %v2632, %v2353
    %v2634 = vadd.f32 %v2633, %v2354
    %v2635 = vadd.f32 %v2634, %v2355
    %v2636 = vadd.f32 %v2635, %v2356
    %v2637 = vadd.f32 %v2636, %v2357
    %v2638 = vadd.f32 %v2637, %v2358
    %v2639 = vadd.f32 %v2638, %v2359
    %v2640 = vadd.f32 %v2639, %v2360
    %v2641 = vadd.f32 %v2640, %v2361
    %v2642 = vadd.f32 %v2641, %v2362
    %v2643 = vadd.f32 %v2642, %v2363
    %v2644 = vadd.f32 %v2643, %v2364
    %v2645 = vadd.f32 %v2644, %v2365
    %v2646 = vadd.f32 %v2645, %v2366
    %v2647 = vadd.f32 %v2646, %v2367
    %v2648 = vadd.f32 %v2647, %v2368
    %v2649 = vadd.f32 %v2648, %v2369
    %v2650 = vadd.f32 %v2649, %v2370
    %v2651 = vadd.f32 %v2650, %v2371
    %v2652 = vadd.f32 %v2651, %v2372
    %v2653 = vrot.slane %v2652, 4
    %v2654 = vadd.f32 %v2652, %v2653
    %v2655 = vrot.slane %v2654, 2
    %v2656 = vadd.f32 %v2654, %v2655
    %v2657 = vrot.slane %v2656, 1
    %v2658 = vadd.f32 %v2656, %v2657
    %v2659 = vadd.f32 %v2373, %v2374
    %v2660 = vadd.f32 %v2659, %v2375
    %v2661 = vadd.f32 %v2660, %v2376
    %v2662 = vadd.f32 %v2661, %v2377
    %v2663 = vadd.f32 %v2662, %v2378
    %v2664 = vadd.f32 %v2663, %v2379
    %v2665 = vadd.f32 %v2664, %v2380
    %v2666 = vadd.f32 %v2665, %v2381
    %v2667 = vadd.f32 %v2666, %v2382
    %v2668 = vadd.f32 %v2667, %v2383
    %v2669 = vadd.f32 %v2668, %v2384
    %v2670 = vadd.f32 %v2669, %v2385
    %v2671 = vadd.f32 %v2670, %v2386
    %v2672 = vadd.f32 %v2671, %v2387
    %v2673 = vadd.f32 %v2672, %v2388
    %v2674 = vadd.f32 %v2673, %v2389
    %v2675 = vadd.f32 %v2674, %v2390
    %v2676 = vadd.f32 %v2675, %v2391
    %v2677 = vadd.f32 %v2676, %v2392
    %v2678 = vadd.f32 %v2677, %v2393
    %v2679 = vadd.f32 %v2678, %v2394
    %v2680 = vadd.f32 %v2679, %v2395
    %v2681 = vadd.f32 %v2680, %v2396
    %v2682 = vadd.f32 %v2681, %v2397
    %v2683 = vadd.f32 %v2682, %v2398
    %v2684 = vadd.f32 %v2683, %v2399
    %v2685 = vadd.f32 %v2684, %v2400
    %v2686 = vadd.f32 %v2685, %v2401
    %v2687 = vadd.f32 %v2686, %v2402
    %v2688 = vadd.f32 %v2687, %v2403
    %v2689 = vadd.f32 %v2688, %v2404
    %v2690 = vrot.slane %v2689, 4
    %v2691 = vadd.f32 %v2689, %v2690
    %v2692 = vrot.slane %v2691, 2
    %v2693 = vadd.f32 %v2691, %v2692
    %v2694 = vrot.slane %v2693, 1
    %v2695 = vadd.f32 %v2693, %v2694
    %v2696 = vadd.f32 %v2405, %v2406
    %v2697 = vadd.f32 %v2696, %v2407
    %v2698 = vadd.f32 %v2697, %v2408
    %v2699 = vadd.f32 %v2698, %v2409
    %v2700 = vadd.f32 %v2699, %v2410
    %v2701 = vadd.f32 %v2700, %v2411
    %v2702 = vadd.f32 %v2701, %v2412
    %v2703 = vadd.f32 %v2702, %v2413
    %v2704 = vadd.f32 %v2703, %v2414
    %v2705 = vadd.f32 %v2704, %v2415
    %v2706 = vadd.f32 %v2705, %v2416
    %v2707 = vadd.f32 %v2706, %v2417
    %v2708 = vadd.f32 %v2707, %v2418
    %v2709 = vadd.f32 %v2708, %v2419
    %v2710 = vadd.f32 %v2709, %v2420
    %v2711 = vadd.f32 %v2710, %v2421
    %v2712 = vadd.f32 %v2711, %v2422
    %v2713 = vadd.f32 %v2712, %v2423
    %v2714 = vadd.f32 %v2713, %v2424
    %v2715 = vadd.f32 %v2714, %v2425
    %v2716 = vadd.f32 %v2715, %v2426
    %v2717 = vadd.f32 %v2716, %v2427
    %v2718 = vadd.f32 %v2717, %v2428
    %v2719 = vadd.f32 %v2718, %v2429
    %v2720 = vadd.f32 %v2719, %v2430
    %v2721 = vadd.f32 %v2720, %v2431
    %v2722 = vadd.f32 %v2721, %v2432
    %v2723 = vadd.f32 %v2722, %v2433
    %v2724 = vadd.f32 %v2723, %v2434
    %v2725 = vadd.f32 %v2724, %v2435
    %v2726 = vadd.f32 %v2725, %v2436
    %v2727 = vrot.slane %v2726, 4
    %v2728 = vadd.f32 %v2726, %v2727
    %v2729 = vrot.slane %v2728, 2
    %v2730 = vadd.f32 %v2728, %v2729
    %v2731 = vrot.slane %v2730, 1
    %v2732 = vadd.f32 %v2730, %v2731
    %v2733 = vrcp.pop 256.0
    %v2734 = vmul.f32 %v2473, %v2733
    %v2735 = vmul.f32 %v2510, %v2733
    %v2736 = vmul.f32 %v2547, %v2733
    %v2737 = vmul.f32 %v2584, %v2733
    %v2738 = vmul.f32 %v2621, %v2733
    %v2739 = vmul.f32 %v2658, %v2733
    %v2740 = vmul.f32 %v2695, %v2733
    %v2741 = vmul.f32 %v2732, %v2733
    %v2742 = vpack.c.bf16 %v2734, %v2734
    %v2743 = vpack.c.bf16 %v2735, %v2735
    %v2744 = vpack.c.bf16 %v2736, %v2736
    %v2745 = vpack.c.bf16 %v2737, %v2737
    %v2746 = vpack.c.bf16 %v2738, %v2738
    %v2747 = vpack.c.bf16 %v2739, %v2739
    %v2748 = vpack.c.bf16 %v2740, %v2740
    %v2749 = vpack.c.bf16 %v2741, %v2741
    %v2750 = vld [vmem:[%s2] sm:$0xf]
    %v2751 = vld [vmem:[%s2 + $0x4] sm:$0xf]
    %v2752 = vld [vmem:[%s2 + $0x8] sm:$0xf]
    %v2753 = vld [vmem:[%s2 + $0xc] sm:$0xf]
    %v2754 = vld [vmem:[%s2 + $0x10] sm:$0xf]
    %v2755 = vld [vmem:[%s2 + $0x14] sm:$0xf]
    %v2756 = vld [vmem:[%s2 + $0x18] sm:$0xf]
    %v2757 = vld [vmem:[%s2 + $0x1c] sm:$0xf]
    %v2758 = vld [vmem:[%s2 + $0x20] sm:$0xf]
    %v2759 = vld [vmem:[%s2 + $0x24] sm:$0xf]
    %v2760 = vld [vmem:[%s2 + $0x28] sm:$0xf]
    %v2761 = vld [vmem:[%s2 + $0x2c] sm:$0xf]
    %v2762 = vld [vmem:[%s2 + $0x30] sm:$0xf]
    %v2763 = vld [vmem:[%s2 + $0x34] sm:$0xf]
    %v2764 = vld [vmem:[%s2 + $0x38] sm:$0xf]
    %v2765 = vld [vmem:[%s2 + $0x3c] sm:$0xf]
    %v2774 = vunpack.c.l.b16 %v2742
    %v2775 = vunpack.c.l.b16 %v2743
    %v2776 = vunpack.c.l.b16 %v2744
    %v2777 = vunpack.c.l.b16 %v2745
    %v2778 = vunpack.c.l.b16 %v2746
    %v2779 = vunpack.c.l.b16 %v2747
    %v2780 = vunpack.c.l.b16 %v2748
    %v2781 = vunpack.c.l.b16 %v2749
    %vm2782 = vcmask 1041409
    %v2783 = vsel %vm2782, %v2775, %v2774
    %vm2784 = vcmask 1042434
    %v2785 = vsel %vm2784, %v2776, %v2783
    %vm2786 = vcmask 1043459
    %v2787 = vsel %vm2786, %v2777, %v2785
    %vm2788 = vcmask 1044484
    %v2789 = vsel %vm2788, %v2778, %v2787
    %vm2790 = vcmask 1045509
    %v2791 = vsel %vm2790, %v2779, %v2789
    %vm2792 = vcmask 1046534
    %v2793 = vsel %vm2792, %v2780, %v2791
    %vm2794 = vcmask 1047559
    %v2795 = vsel %vm2794, %v2781, %v2793
    %v2796 = vpack.c.b16 %v2795, %v2795
    %v2814 = vunpack.c.l.b16 %v2750
    %v2815 = vunpack.c.l.b16 %v2751
    %v2816 = vunpack.c.l.b16 %v2752
    %v2817 = vunpack.c.l.b16 %v2753
    %v2818 = vunpack.c.l.b16 %v2754
    %v2819 = vunpack.c.l.b16 %v2755
    %v2820 = vunpack.c.l.b16 %v2756
    %v2821 = vunpack.c.l.b16 %v2757
    %v2822 = vunpack.c.l.b16 %v2758
    %v2823 = vunpack.c.l.b16 %v2759
    %v2824 = vunpack.c.l.b16 %v2760
    %v2825 = vunpack.c.l.b16 %v2761
    %v2826 = vunpack.c.l.b16 %v2762
    %v2827 = vunpack.c.l.b16 %v2763
    %v2828 = vunpack.c.l.b16 %v2764
    %v2829 = vunpack.c.l.b16 %v2765
    %v2830 = vpack.c.b16 %v2815, %v2814
    %v2831 = vpack.c.b16 %v2817, %v2816
    %v2832 = vpack.c.b16 %v2819, %v2818
    %v2833 = vpack.c.b16 %v2821, %v2820
    %v2834 = vpack.c.b16 %v2823, %v2822
    %v2835 = vpack.c.b16 %v2825, %v2824
    %v2836 = vpack.c.b16 %v2827, %v2826
    %v2837 = vpack.c.b16 %v2829, %v2828
    %2846 = vmatprep.subr.bf16.mxu0 0
    %2847 = vmatpush1.bf16.msra.mxu0 %v2837
    %2848 = vmatprep.subr.bf16.mxu0 0
    %2849 = vmatpush1.bf16.msra.mxu0 %v2836
    %2850 = vmatprep.subr.bf16.mxu0 0
    %2851 = vmatpush1.bf16.msra.mxu0 %v2835
    %2852 = vmatprep.subr.bf16.mxu0 0
    %2853 = vmatpush1.bf16.msra.mxu0 %v2834
    %2854 = vmatprep.subr.bf16.mxu0 0
    %2855 = vmatpush1.bf16.msra.mxu0 %v2833
    %2856 = vmatprep.subr.bf16.mxu0 0
    %2857 = vmatpush1.bf16.msra.mxu0 %v2832
    %2858 = vmatprep.subr.bf16.mxu0 0
    %2859 = vmatpush1.bf16.msra.mxu0 %v2831
    %2860 = vmatprep.subr.bf16.mxu0 0
    %2861 = vmatpush1.bf16.msra.mxu0 %v2830
    %2862 = vmatprep.subr.bf16.mxu0 0
    %2863 = vmatpush2.bf16.msra.mxu0 0
    %2864 = vmatprep.subr.bf16.mxu0 0
    %2865 = vmatpush2.bf16.msra.mxu0 0
    %2866 = vmatprep.subr.bf16.mxu0 0
    %2867 = vmatpush2.bf16.msra.mxu0 0
    %2868 = vmatprep.subr.bf16.mxu0 0
    %2869 = vmatpush2.bf16.msra.mxu0 0
    %2870 = vmatprep.subr.bf16.mxu0 0
    %2871 = vmatpush2.bf16.msra.mxu0 0
    %2872 = vmatprep.subr.bf16.mxu0 0
    %2873 = vmatpush2.bf16.msra.mxu0 0
    %2874 = vmatprep.subr.bf16.mxu0 0
    %2875 = vmatpush2.bf16.msra.mxu0 0
    %2876 = vmatprep.subr.bf16.mxu0 0
    %2877 = vmatpush2.bf16.msra.mxu0 0
    %2878 = vmatprep.mubr.bf16.mxu0 0
    %2879 = vmatmul.mubr.bf16.gmra.mxu0 %v2796
    %v2880 = vpop.f32.mrf.mxu0
    %v2881 = vadd.f32 0.0, %v2880
    %v2882 = vpop.f32.mrf.mxu0
    %v2883 = vpop.f32.mrf.mxu0
    %v2884 = vpop.f32.mrf.mxu0
    %2885 = vdwg.mxu0
    %v2886 = vrot.slane %v2881, 4
    %v2887 = vadd.f32 %v2881, %v2886
    %v2888 = vrot.slane %v2887, 2
    %v2889 = vadd.f32 %v2887, %v2888
    %v2890 = vrot.slane %v2889, 1
    %v2891 = vadd.f32 %v2889, %v2890
    %v2892 = vrcp.pop 8.0
    %v2893 = vmul.f32 %v2891, %v2892
    %v2894 = vsub.f32 %v2881, %v2893
    %v2895 = vmul.f32 %v2894, %v2894
    %v2896 = vrot.slane %v2895, 4
    %v2897 = vadd.f32 %v2895, %v2896
    %v2898 = vrot.slane %v2897, 2
    %v2899 = vadd.f32 %v2897, %v2898
    %v2900 = vrot.slane %v2899, 1
    %v2901 = vadd.f32 %v2899, %v2900
    %v2902 = vmul.f32 %v2901, %v2892
    %v2903 = vadd.f32 %v2902, 1e-05
    %v2904 = vrsqrt.pop %v2903
    %v2905 = vmul.f32 %v2894, %v2904
    %v2906 = vld [vmem:[%s3] sm:$0x1]
    %v2908 = vlaneseq
    %v2909 = vshrl.u32 %v2908, 7
    %v2910 = vsub.s32 0, %v2909
    %v2911 = vrot.slane %v2906, %v2910
    %v2913 = vmul.f32 %v2905, %v2911
    %v2914 = vld [vmem:[%s4] sm:$0x1]
    %v2916 = vlaneseq
    %v2917 = vshrl.u32 %v2916, 7
    %v2918 = vsub.s32 0, %v2917
    %v2919 = vrot.slane %v2914, %v2918
    %v2921 = vadd.f32 %v2913, %v2919
    %v2922 = vmax.f32 %v2921, 0.0
    %v2923 = vpack.c.bf16 %v2922, %v2922
    %v2924 = vld [vmem:[%s5] sm:$0xf]
    %v2925 = vld [vmem:[%s5 + $0x4] sm:$0xf]
    %v2926 = vld [vmem:[%s5 + $0x8] sm:$0xf]
    %v2927 = vld [vmem:[%s5 + $0xc] sm:$0xf]
    %v2928 = vld [vmem:[%s5 + $0x10] sm:$0xf]
    %v2929 = vld [vmem:[%s5 + $0x14] sm:$0xf]
    %v2930 = vld [vmem:[%s5 + $0x18] sm:$0xf]
    %v2931 = vld [vmem:[%s5 + $0x1c] sm:$0xf]
    %v2932 = vld [vmem:[%s5 + $0x20] sm:$0xf]
    %v2933 = vld [vmem:[%s5 + $0x24] sm:$0xf]
    %v2934 = vld [vmem:[%s5 + $0x28] sm:$0xf]
    %v2935 = vld [vmem:[%s5 + $0x2c] sm:$0xf]
    %v2936 = vld [vmem:[%s5 + $0x30] sm:$0xf]
    %v2937 = vld [vmem:[%s5 + $0x34] sm:$0xf]
    %v2938 = vld [vmem:[%s5 + $0x38] sm:$0xf]
    %v2939 = vld [vmem:[%s5 + $0x3c] sm:$0xf]
    %v2940 = vld [vmem:[%s6] sm:$0x1]
    %v2942 = vlaneseq
    %v2943 = vshrl.u32 %v2942, 7
    %v2944 = vsub.s32 0, %v2943
    %v2945 = vrot.slane %v2940, %v2944
    %v2963 = vunpack.c.l.b16 %v2924
    %v2964 = vunpack.c.l.b16 %v2925
    %v2965 = vunpack.c.l.b16 %v2926
    %v2966 = vunpack.c.l.b16 %v2927
    %v2967 = vunpack.c.l.b16 %v2928
    %v2968 = vunpack.c.l.b16 %v2929
    %v2969 = vunpack.c.l.b16 %v2930
    %v2970 = vunpack.c.l.b16 %v2931
    %v2971 = vunpack.c.l.b16 %v2932
    %v2972 = vunpack.c.l.b16 %v2933
    %v2973 = vunpack.c.l.b16 %v2934
    %v2974 = vunpack.c.l.b16 %v2935
    %v2975 = vunpack.c.l.b16 %v2936
    %v2976 = vunpack.c.l.b16 %v2937
    %v2977 = vunpack.c.l.b16 %v2938
    %v2978 = vunpack.c.l.b16 %v2939
    %v2979 = vpack.c.b16 %v2964, %v2963
    %v2980 = vpack.c.b16 %v2966, %v2965
    %v2981 = vpack.c.b16 %v2968, %v2967
    %v2982 = vpack.c.b16 %v2970, %v2969
    %v2983 = vpack.c.b16 %v2972, %v2971
    %v2984 = vpack.c.b16 %v2974, %v2973
    %v2985 = vpack.c.b16 %v2976, %v2975
    %v2986 = vpack.c.b16 %v2978, %v2977
    %2995 = vmatprep.subr.bf16.mxu0 0
    %2996 = vmatpush1.bf16.msra.mxu0 %v2986
    %2997 = vmatprep.subr.bf16.mxu0 0
    %2998 = vmatpush1.bf16.msra.mxu0 %v2985
    %2999 = vmatprep.subr.bf16.mxu0 0
    %3000 = vmatpush1.bf16.msra.mxu0 %v2984
    %3001 = vmatprep.subr.bf16.mxu0 0
    %3002 = vmatpush1.bf16.msra.mxu0 %v2983
    %3003 = vmatprep.subr.bf16.mxu0 0
    %3004 = vmatpush1.bf16.msra.mxu0 %v2982
    %3005 = vmatprep.subr.bf16.mxu0 0
    %3006 = vmatpush1.bf16.msra.mxu0 %v2981
    %3007 = vmatprep.subr.bf16.mxu0 0
    %3008 = vmatpush1.bf16.msra.mxu0 %v2980
    %3009 = vmatprep.subr.bf16.mxu0 0
    %3010 = vmatpush1.bf16.msra.mxu0 %v2979
    %3011 = vmatprep.subr.bf16.mxu0 0
    %3012 = vmatpush2.bf16.msra.mxu0 0
    %3013 = vmatprep.subr.bf16.mxu0 0
    %3014 = vmatpush2.bf16.msra.mxu0 0
    %3015 = vmatprep.subr.bf16.mxu0 0
    %3016 = vmatpush2.bf16.msra.mxu0 0
    %3017 = vmatprep.subr.bf16.mxu0 0
    %3018 = vmatpush2.bf16.msra.mxu0 0
    %3019 = vmatprep.subr.bf16.mxu0 0
    %3020 = vmatpush2.bf16.msra.mxu0 0
    %3021 = vmatprep.subr.bf16.mxu0 0
    %3022 = vmatpush2.bf16.msra.mxu0 0
    %3023 = vmatprep.subr.bf16.mxu0 0
    %3024 = vmatpush2.bf16.msra.mxu0 0
    %3025 = vmatprep.subr.bf16.mxu0 0
    %3026 = vmatpush2.bf16.msra.mxu0 0
    %3027 = vmatprep.mubr.bf16.mxu0 0
    %3028 = vmatmul.mubr.bf16.gmra.mxu0 %v2923
    %v3029 = vpop.f32.mrf.mxu0
    %v3030 = vadd.f32 %v2945, %v3029
    %v3031 = vpop.f32.mrf.mxu0
    %v3032 = vpop.f32.mrf.mxu0
    %v3033 = vpop.f32.mrf.mxu0
    %3034 = vdwg.mxu0
    %v3035 = vpack.c.bf16 %v3030, %v3030
    %v3036 = vld [vmem:[%s7] sm:$0xf]
    %v3037 = vld [vmem:[%s7 + $0x4] sm:$0xf]
    %v3038 = vld [vmem:[%s7 + $0x8] sm:$0xf]
    %v3039 = vld [vmem:[%s7 + $0xc] sm:$0xf]
    %v3040 = vld [vmem:[%s7 + $0x10] sm:$0xf]
    %v3041 = vld [vmem:[%s7 + $0x14] sm:$0xf]
    %v3042 = vld [vmem:[%s7 + $0x18] sm:$0xf]
    %v3043 = vld [vmem:[%s7 + $0x1c] sm:$0xf]
    %v3044 = vld [vmem:[%s7 + $0x20] sm:$0xf]
    %v3045 = vld [vmem:[%s7 + $0x24] sm:$0xf]
    %v3046 = vld [vmem:[%s7 + $0x28] sm:$0xf]
    %v3047 = vld [vmem:[%s7 + $0x2c] sm:$0xf]
    %v3048 = vld [vmem:[%s7 + $0x30] sm:$0xf]
    %v3049 = vld [vmem:[%s7 + $0x34] sm:$0xf]
    %v3050 = vld [vmem:[%s7 + $0x38] sm:$0xf]
    %v3051 = vld [vmem:[%s7 + $0x3c] sm:$0xf]
    %v3052 = vld [vmem:[%s8] sm:$0x1]
    %v3054 = vlaneseq
    %v3055 = vshrl.u32 %v3054, 7
    %v3056 = vsub.s32 0, %v3055
    %v3057 = vrot.slane %v3052, %v3056
    %v3075 = vunpack.c.l.b16 %v3036
    %v3076 = vunpack.c.l.b16 %v3037
    %v3077 = vunpack.c.l.b16 %v3038
    %v3078 = vunpack.c.l.b16 %v3039
    %v3079 = vunpack.c.l.b16 %v3040
    %v3080 = vunpack.c.l.b16 %v3041
    %v3081 = vunpack.c.l.b16 %v3042
    %v3082 = vunpack.c.l.b16 %v3043
    %v3083 = vunpack.c.l.b16 %v3044
    %v3084 = vunpack.c.l.b16 %v3045
    %v3085 = vunpack.c.l.b16 %v3046
    %v3086 = vunpack.c.l.b16 %v3047
    %v3087 = vunpack.c.l.b16 %v3048
    %v3088 = vunpack.c.l.b16 %v3049
    %v3089 = vunpack.c.l.b16 %v3050
    %v3090 = vunpack.c.l.b16 %v3051
    %v3091 = vpack.c.b16 %v3076, %v3075
    %v3092 = vpack.c.b16 %v3078, %v3077
    %v3093 = vpack.c.b16 %v3080, %v3079
    %v3094 = vpack.c.b16 %v3082, %v3081
    %v3095 = vpack.c.b16 %v3084, %v3083
    %v3096 = vpack.c.b16 %v3086, %v3085
    %v3097 = vpack.c.b16 %v3088, %v3087
    %v3098 = vpack.c.b16 %v3090, %v3089
    %3107 = vmatprep.subr.bf16.mxu0 0
    %3108 = vmatpush1.bf16.msra.mxu0 %v3098
    %3109 = vmatprep.subr.bf16.mxu0 0
    %3110 = vmatpush1.bf16.msra.mxu0 %v3097
    %3111 = vmatprep.subr.bf16.mxu0 0
    %3112 = vmatpush1.bf16.msra.mxu0 %v3096
    %3113 = vmatprep.subr.bf16.mxu0 0
    %3114 = vmatpush1.bf16.msra.mxu0 %v3095
    %3115 = vmatprep.subr.bf16.mxu0 0
    %3116 = vmatpush1.bf16.msra.mxu0 %v3094
    %3117 = vmatprep.subr.bf16.mxu0 0
    %3118 = vmatpush1.bf16.msra.mxu0 %v3093
    %3119 = vmatprep.subr.bf16.mxu0 0
    %3120 = vmatpush1.bf16.msra.mxu0 %v3092
    %3121 = vmatprep.subr.bf16.mxu0 0
    %3122 = vmatpush1.bf16.msra.mxu0 %v3091
    %3123 = vmatprep.subr.bf16.mxu0 0
    %3124 = vmatpush2.bf16.msra.mxu0 0
    %3125 = vmatprep.subr.bf16.mxu0 0
    %3126 = vmatpush2.bf16.msra.mxu0 0
    %3127 = vmatprep.subr.bf16.mxu0 0
    %3128 = vmatpush2.bf16.msra.mxu0 0
    %3129 = vmatprep.subr.bf16.mxu0 0
    %3130 = vmatpush2.bf16.msra.mxu0 0
    %3131 = vmatprep.subr.bf16.mxu0 0
    %3132 = vmatpush2.bf16.msra.mxu0 0
    %3133 = vmatprep.subr.bf16.mxu0 0
    %3134 = vmatpush2.bf16.msra.mxu0 0
    %3135 = vmatprep.subr.bf16.mxu0 0
    %3136 = vmatpush2.bf16.msra.mxu0 0
    %3137 = vmatprep.subr.bf16.mxu0 0
    %3138 = vmatpush2.bf16.msra.mxu0 0
    %3139 = vmatprep.mubr.bf16.mxu0 0
    %3140 = vmatmul.mubr.bf16.gmra.mxu0 %v3035
    %v3141 = vpop.f32.mrf.mxu0
    %v3142 = vadd.f32 %v3057, %v3141
    %v3143 = vpop.f32.mrf.mxu0
    %v3144 = vpop.f32.mrf.mxu0
    %v3145 = vpop.f32.mrf.mxu0
    %3146 = vdwg.mxu0
    %3147 = vst [vmem:[%s9] sm:$0xff] %v3142
    %3148 = vst [vmem:[#allocation2] sm:$0xff] %v3030
    // Predicated region
    $region38: #{projection_net_forward.1} parent=1 // pred_check
      _
    $region39: #{projection_net_forward.1} parent=1 // pred_check_branch
      %3150 = sbr.rel (0) target = $region41
    $region40: #{projection_net_forward.1} parent=1 // pred_region
      _
    $region41: #{projection_net_forward.1} parent=1 // pred_fallthru
      _
    // Predicated region
    $region42: #{projection_net_forward.1} parent=1 // pred_check
      _
    $region43: #{projection_net_forward.1} parent=1 // pred_check_branch
      %3152 = sbr.rel (0) target = $region45
    $region44: #{projection_net_forward.1} parent=1 // pred_region
      %s3154 = ssub.s32 128, 128
      %3155 = vsyncadd [#allocation3], %s3154
      %s3157 = sshll.u32 [#allocation2], 4
      %s3158 = int_to_ptr.vmem [resolvable:$true] %s3157
      %3160 = dma.vmem_to_hbm [thread:$0]  %s3158, 128, %s10, [#allocation3]
    $region45: #{projection_net_forward.1} parent=1 // pred_fallthru
      _
    // Predicated region
    $region46: #{projection_net_forward.1} parent=1 // pred_check
      _
    $region47: #{projection_net_forward.1} parent=1 // pred_check_branch
      %3162 = sbr.rel (0) target = $region49
    $region48: #{projection_net_forward.1} parent=1 // pred_region
      _
    $region49: #{projection_net_forward.1} parent=1 // pred_fallthru
      _
    // Predicated region
    $region50: #{projection_net_forward.1} parent=1 // pred_check
      _
    $region51: #{projection_net_forward.1} parent=1 // pred_check_branch
      %3164 = sbr.rel (0) target = $region53
    $region52: #{projection_net_forward.1} parent=1 // pred_region
      %3165 = dma.done [#allocation3], 128
    $region53: #{projection_net_forward.1} parent=1 // pred_fallthru
      _
    %3166 = vsyncpa [#allocation3], 1

</llo_original>
